<compile_context>
chip_gen: v7x
topology: tpu7x:2x2x1
jax: 0.10.0
libtpu: 0.0.40
codegen_flags: <defaults>
</compile_context>

<pallas_src>
import functools
import math

import jax
import jax.numpy as jnp
from jax.experimental import pallas as pl
from jax.experimental.pallas import tpu as pltpu


# ---------------------------------------------------------------------------
# Small-shape config (synthetic BERT)
# ---------------------------------------------------------------------------
VOCAB = 50          # vocab size
MAX_POS = 16        # max position embeddings
DIM = 32            # hidden size
N_HEADS = 4         # attention heads
HEAD_DIM = DIM // N_HEADS
FFN_DIM = 64        # feed-forward inner size
N_LAYERS = 2        # transformer blocks
NUM_LABELS = 2      # classifier output
CLS_HIDDEN = 256    # classifier hidden (Linear(hidden_size, 256))
LOGITS_PAD = 128    # lane-dense padded logits width (sliced in wrapper)
LN_EPS = 1e-12

# ----- packed encoder-slab layout (width ENC_W = 3*DIM = 96) ----------------
ENC_W = 3 * DIM
ROWS_QKV = 0                          # qkv_w : DIM rows, cols 0:3*DIM
ROWS_FFN1 = DIM                       # ffn1_w: DIM rows, cols 0:FFN_DIM
ROWS_FFN2 = 2 * DIM                   # ffn2_w: FFN_DIM rows, cols 0:DIM
ROWS_OW = 2 * DIM + FFN_DIM           # o_w   : DIM rows, cols 0:DIM
ROWS_VEC = 2 * DIM + FFN_DIM + DIM    # 8 bias/LN rows
L_STRIDE = ROWS_VEC + 8               # rows per layer (168)
VEC_QKV_B, VEC_FFN1_B, VEC_FFN2_B, VEC_O_B = 0, 1, 2, 3
VEC_LN1_G, VEC_LN1_B, VEC_LN2_G, VEC_LN2_B = 4, 5, 6, 7
ENC_TAIL = N_LAYERS * L_STRIDE        # pool_w: DIM rows, cols 0:DIM
TAIL_VEC = ENC_TAIL + DIM             # +0 emb_ln_g, +1 emb_ln_b, +2 pool_b
ENC_ROWS = TAIL_VEC + 8               # 376

# ----- packed head-slab layout (width CLS_HIDDEN = 256) ---------------------
HEAD_W1 = 0                           # cls_w1 : DIM rows
HEAD_B1 = DIM                         # cls_b1 : 1 row
HEAD_W2T = DIM + 1                    # cls_w2^T : NUM_LABELS rows
HEAD_B2 = DIM + 1 + NUM_LABELS        # cls_b2 : 1 row (first NUM_LABELS cols)
HEAD_ROWS = 40


# ---------------------------------------------------------------------------
# Pallas helpers
# ---------------------------------------------------------------------------
def _spec(shape):
    nd = len(shape)
    return pl.BlockSpec(shape, lambda i, _nd=nd: (0,) * _nd)


# ---------------------------------------------------------------------------
# Single fused forward kernel
# ---------------------------------------------------------------------------
def _bert_kernel(emb_ref, bias_ref, enc_ref, head_ref, out_ref,
                 *, batch, seq, eps):
    n_heads, head_dim, dim, ffn = N_HEADS, HEAD_DIM, DIM, FFN_DIM
    bs = batch * seq

    def vec(row, width):
        return enc_ref[row:row + 1, 0:width]                  # (1, width)

    def layer_norm(x, g, b):
        mean = jnp.mean(x, axis=-1, keepdims=True)
        xc = x - mean
        var = jnp.mean(xc * xc, axis=-1, keepdims=True)
        return xc * jax.lax.rsqrt(var + eps) * g + b

    def gelu(x):
        # TODO(synk): HF BERT uses exact erf-GELU; tanh approximation used here
        # (erf lowering on Mosaic is not guaranteed; difference is ~1e-3).
        c = math.sqrt(2.0 / math.pi)
        return 0.5 * x * (1.0 + jnp.tanh(c * (x + 0.044715 * x * x * x)))

    # ---- embedding LayerNorm ----------------------------------------------
    h = layer_norm(emb_ref[...], vec(TAIL_VEC + 0, dim), vec(TAIL_VEC + 1, dim))

    # ---- additive attention bias (block-diag over (head,batch) + key pad),
    #      precomputed in the wrapper, read once and reused across layers ----
    bias = bias_ref[...]                                      # (H*B*S, H*B*S)

    # ---- transformer layers (statically unrolled, all resident in VMEM) ---
    for l in range(N_LAYERS):
        base = l * L_STRIDE
        v = base + ROWS_VEC

        # fused lane-dense QKV projection; 1/sqrt(Dh) already folded into W_q.
        qkv = (jnp.dot(h, enc_ref[base + ROWS_QKV:base + ROWS_QKV + dim, :],
                       preferred_element_type=jnp.float32)
               + vec(v + VEC_QKV_B, 3 * dim))                 # (B*S, 3*D)

        # stack heads along rows (head-major): (H*B*S, Dh), no scratch writes
        q_all = jnp.concatenate(
            [qkv[:, hh * head_dim:(hh + 1) * head_dim]
             for hh in range(n_heads)], axis=0)
        k_all = jnp.concatenate(
            [qkv[:, dim + hh * head_dim:dim + (hh + 1) * head_dim]
             for hh in range(n_heads)], axis=0)
        v_all = jnp.concatenate(
            [qkv[:, 2 * dim + hh * head_dim:2 * dim + (hh + 1) * head_dim]
             for hh in range(n_heads)], axis=0)

        # ONE score matmul + ONE softmax + ONE P@V matmul for all (b, h)
        s = jax.lax.dot_general(q_all, k_all, (((1,), (1,)), ((), ())),
                                preferred_element_type=jnp.float32)
        s = s + bias
        s = s - jnp.max(s, axis=-1, keepdims=True)
        p = jnp.exp(s)
        p = p * pl.reciprocal(jnp.sum(p, axis=-1, keepdims=True), approx=True)
        ctx_all = jnp.dot(p, v_all,
                          preferred_element_type=jnp.float32)  # (H*B*S, Dh)

        # heads back to lanes in-register: (B*S, D)
        ctx = jnp.concatenate(
            [ctx_all[hh * bs:(hh + 1) * bs, :] for hh in range(n_heads)],
            axis=1)

        # attention output projection + residual + LayerNorm (post-LN BERT)
        sa = (jnp.dot(ctx, enc_ref[base + ROWS_OW:base + ROWS_OW + dim, 0:dim],
                      preferred_element_type=jnp.float32)
              + vec(v + VEC_O_B, dim))
        h = layer_norm(sa + h, vec(v + VEC_LN1_G, dim), vec(v + VEC_LN1_B, dim))

        # feed-forward + residual + LayerNorm
        f = gelu(jnp.dot(h, enc_ref[base + ROWS_FFN1:base + ROWS_FFN1 + dim, 0:ffn],
                         preferred_element_type=jnp.float32)
                 + vec(v + VEC_FFN1_B, ffn))
        f = (jnp.dot(f, enc_ref[base + ROWS_FFN2:base + ROWS_FFN2 + ffn, 0:dim],
                     preferred_element_type=jnp.float32)
             + vec(v + VEC_FFN2_B, dim))
        h = layer_norm(f + h, vec(v + VEC_LN2_G, dim), vec(v + VEC_LN2_B, dim))

    # ---- pooler + classifier head, batched over all B CLS rows -------------
    cls_rows = jnp.concatenate(
        [h[b * seq:b * seq + 1, :] for b in range(batch)], axis=0)  # (B, D)
    pooled = jnp.tanh(
        jnp.dot(cls_rows, enc_ref[ENC_TAIL:ENC_TAIL + dim, 0:dim],
                preferred_element_type=jnp.float32) + vec(TAIL_VEC + 2, dim))
    hid = jnp.maximum(
        jnp.dot(pooled, head_ref[HEAD_W1:HEAD_W1 + dim, :],
                preferred_element_type=jnp.float32)
        + head_ref[HEAD_B1:HEAD_B1 + 1, :], 0.0)
    # Dropout(0.2) is identity in eval mode.
    logits = jax.lax.dot_general(
        hid, head_ref[HEAD_W2T:HEAD_W2T + NUM_LABELS, :],
        (((1,), (1,)), ((), ())), preferred_element_type=jnp.float32)
    logits = logits + head_ref[HEAD_B2:HEAD_B2 + 1, 0:NUM_LABELS]

    # lane-dense (B, 128) store; wrapper slices back to NUM_LABELS
    out_ref[...] = jnp.concatenate(
        [logits, jnp.zeros((batch, LOGITS_PAD - NUM_LABELS), jnp.float32)],
        axis=1).astype(out_ref.dtype)


# ---------------------------------------------------------------------------
# Forward wrapper: embedding gather + mask build (glue) + one fused pallas_call
# ---------------------------------------------------------------------------
def forward(packed, input_ids, attention_mask):
    B, S = input_ids.shape

    # embedding gather + sum is plain-JAX glue (one fused XLA op)
    we = jnp.take(packed["word_emb"], input_ids, axis=0)           # (B, S, D)
    pe = packed["pos_emb"][:S][None, :, :]                         # (1, S, D)
    te = packed["type_emb"][0][None, None, :]                      # token_type_ids == 0
    emb = (we + pe + te).reshape(B * S, DIM).astype(jnp.float32)

    # block-diagonal (head, batch) + key-padding additive mask, built once
    st = N_HEADS * B * S
    blk = jnp.arange(st) // S                                      # (h*B + b) id
    key_ok = jnp.tile(attention_mask.reshape(-1) > 0, (N_HEADS,))  # (st,)
    attn_bias = jnp.where((blk[:, None] == blk[None, :]) & key_ok[None, :],
                          0.0, -1e9).astype(jnp.float32)           # (st, st)

    kernel = functools.partial(_bert_kernel, batch=B, seq=S, eps=LN_EPS)
    args = (emb, attn_bias, packed["enc_slab"], packed["head_slab"])

    logits_pad = pl.pallas_call(
        kernel,
        grid=(1,),
        in_specs=[_spec(a.shape) for a in args],
        out_specs=_spec((B, LOGITS_PAD)),
        out_shape=jax.ShapeDtypeStruct((B, LOGITS_PAD), jnp.float32),
        compiler_params=pltpu.CompilerParams(
            dimension_semantics=("arbitrary",),
            vmem_limit_bytes=32 * 1024 * 1024),
    )(*args)

    return logits_pad[:, :NUM_LABELS]


# ---------------------------------------------------------------------------
# Deterministic parameter initialization + packing into DMA slabs
# ---------------------------------------------------------------------------
def init_params(key):
    def nrm(k, shape, scale=0.02):
        return (scale * jax.random.normal(k, shape)).astype(jnp.float32)

    keys = iter(jax.random.split(key, 16))
    return {
        "word_emb": nrm(next(keys), (VOCAB, DIM)),
        "pos_emb": nrm(next(keys), (MAX_POS, DIM)),
        "type_emb": nrm(next(keys), (2, DIM)),
        "emb_ln_g": jnp.ones((1, DIM), jnp.float32),
        "emb_ln_b": jnp.zeros((1, DIM), jnp.float32),
        "qkv_w": nrm(next(keys), (N_LAYERS, DIM, 3 * DIM)),
        "qkv_b": jnp.zeros((N_LAYERS, 1, 3 * DIM), jnp.float32),
        "o_w": nrm(next(keys), (N_LAYERS, DIM, DIM)),
        "o_b": jnp.zeros((N_LAYERS, 1, DIM), jnp.float32),
        "ln1_g": jnp.ones((N_LAYERS, 1, DIM), jnp.float32),
        "ln1_b": jnp.zeros((N_LAYERS, 1, DIM), jnp.float32),
        "ffn1_w": nrm(next(keys), (N_LAYERS, DIM, FFN_DIM)),
        "ffn1_b": jnp.zeros((N_LAYERS, 1, FFN_DIM), jnp.float32),
        "ffn2_w": nrm(next(keys), (N_LAYERS, FFN_DIM, DIM)),
        "ffn2_b": jnp.zeros((N_LAYERS, 1, DIM), jnp.float32),
        "ln2_g": jnp.ones((N_LAYERS, 1, DIM), jnp.float32),
        "ln2_b": jnp.zeros((N_LAYERS, 1, DIM), jnp.float32),
        "pool_w": nrm(next(keys), (DIM, DIM)),
        "pool_b": jnp.zeros((1, DIM), jnp.float32),
        "cls_w1": nrm(next(keys), (DIM, CLS_HIDDEN)),
        "cls_b1": jnp.zeros((1, CLS_HIDDEN), jnp.float32),
        "cls_w2": nrm(next(keys), (CLS_HIDDEN, NUM_LABELS)),
        "cls_b2": jnp.zeros((1, NUM_LABELS), jnp.float32),
    }


def pack_params(p):
    """Pack all weights into two slabs (one DMA each); fold 1/sqrt(Dh) into Q."""
    scale = 1.0 / math.sqrt(HEAD_DIM)
    enc = jnp.zeros((ENC_ROWS, ENC_W), jnp.float32)
    for l in range(N_LAYERS):
        b = l * L_STRIDE
        qw = p["qkv_w"][l].at[:, :DIM].multiply(scale)   # scale folded into W_q
        qb = p["qkv_b"][l].at[:, :DIM].multiply(scale)   # and into b_q
        enc = enc.at[b + ROWS_QKV:b + ROWS_QKV + DIM, :3 * DIM].set(qw)
        enc = enc.at[b + ROWS_FFN1:b + ROWS_FFN1 + DIM, :FFN_DIM].set(p["ffn1_w"][l])
        enc = enc.at[b + ROWS_FFN2:b + ROWS_FFN2 + FFN_DIM, :DIM].set(p["ffn2_w"][l])
        enc = enc.at[b + ROWS_OW:b + ROWS_OW + DIM, :DIM].set(p["o_w"][l])
        v = b + ROWS_VEC
        enc = enc.at[v + VEC_QKV_B, :3 * DIM].set(qb[0])
        enc = enc.at[v + VEC_FFN1_B, :FFN_DIM].set(p["ffn1_b"][l][0])
        enc = enc.at[v + VEC_FFN2_B, :DIM].set(p["ffn2_b"][l][0])
        enc = enc.at[v + VEC_O_B, :DIM].set(p["o_b"][l][0])
        enc = enc.at[v + VEC_LN1_G, :DIM].set(p["ln1_g"][l][0])
        enc = enc.at[v + VEC_LN1_B, :DIM].set(p["ln1_b"][l][0])
        enc = enc.at[v + VEC_LN2_G, :DIM].set(p["ln2_g"][l][0])
        enc = enc.at[v + VEC_LN2_B, :DIM].set(p["ln2_b"][l][0])
    enc = enc.at[ENC_TAIL:ENC_TAIL + DIM, :DIM].set(p["pool_w"])
    enc = enc.at[TAIL_VEC + 0, :DIM].set(p["emb_ln_g"][0])
    enc = enc.at[TAIL_VEC + 1, :DIM].set(p["emb_ln_b"][0])
    enc = enc.at[TAIL_VEC + 2, :DIM].set(p["pool_b"][0])

    head = jnp.zeros((HEAD_ROWS, CLS_HIDDEN), jnp.float32)
    head = head.at[HEAD_W1:HEAD_W1 + DIM, :].set(p["cls_w1"])
    head = head.at[HEAD_B1, :].set(p["cls_b1"][0])
    head = head.at[HEAD_W2T:HEAD_W2T + NUM_LABELS, :].set(p["cls_w2"].T)
    head = head.at[HEAD_B2, :NUM_LABELS].set(p["cls_b2"][0])

    return {"word_emb": p["word_emb"], "pos_emb": p["pos_emb"],
            "type_emb": p["type_emb"], "enc_slab": enc, "head_slab": head}


# ---------------------------------------------------------------------------
if __name__ == "__main__":
    key = jax.random.PRNGKey(0)
    k_param, k_ids = jax.random.split(key)

    B, S = 2, 8
    packed = pack_params(init_params(k_param))
    input_ids = jax.random.randint(k_ids, (B, S), 0, VOCAB, dtype=jnp.int32)
    # second example has 2 padded positions
    attention_mask = jnp.ones((B, S), jnp.int32).at[1, 6:].set(0)

    logits = jax.jit(forward)(packed, input_ids, attention_mask)
    jax.block_until_ready(logits)
    assert logits.shape == (B, NUM_LABELS)
    assert bool(jnp.all(jnp.isfinite(logits)))
    print("KERNEL_OK")
</pallas_src>

<mosaic_0001>
module attributes {stable_mosaic.version = 11 : i64} {
  func.func @_bert_kernel(%arg0: i32, %arg1: memref<16x32xf32, #tpu.memory_space<vmem>>, %arg2: memref<64x64xf32, #tpu.memory_space<vmem>>, %arg3: memref<376x96xf32, #tpu.memory_space<vmem>>, %arg4: memref<40x256xf32, #tpu.memory_space<vmem>>, %arg5: memref<2x128xf32, #tpu.memory_space<vmem>>) attributes {dimension_semantics = [#tpu.dimension_semantics<arbitrary>], iteration_bounds = array<i64: 1>, scalar_prefetch = 0 : i64, scratch_operands = 0 : i64, tpu.core_type = #tpu.core_type<tc>, window_params = [{pipeline_mode = #tpu.pipeline_mode<synchronous>, transform_indices = @transform_0, window_bounds = array<i64: 16, 32>}, {pipeline_mode = #tpu.pipeline_mode<synchronous>, transform_indices = @transform_1, window_bounds = array<i64: 64, 64>}, {pipeline_mode = #tpu.pipeline_mode<synchronous>, transform_indices = @transform_2, window_bounds = array<i64: 376, 96>}, {pipeline_mode = #tpu.pipeline_mode<synchronous>, transform_indices = @transform_3, window_bounds = array<i64: 40, 256>}, {pipeline_mode = #tpu.pipeline_mode<synchronous>, transform_indices = @transform_4, window_bounds = array<i64: 2, 128>}]} {
    %c0 = arith.constant 0 : index
    %c0_0 = arith.constant 0 : index
    %0 = vector.load %arg1[%c0, %c0_0] : memref<16x32xf32, #tpu.memory_space<vmem>>, vector<16x32xf32>
    %c368 = arith.constant 368 : index
    %c0_1 = arith.constant 0 : index
    %1 = vector.load %arg3[%c368, %c0_1] : memref<376x96xf32, #tpu.memory_space<vmem>>, vector<1x32xf32>
    %c369 = arith.constant 369 : index
    %c0_2 = arith.constant 0 : index
    %2 = vector.load %arg3[%c369, %c0_2] : memref<376x96xf32, #tpu.memory_space<vmem>>, vector<1x32xf32>
    %cst = arith.constant dense<0.000000e+00> : vector<16xf32>
    %3 = vector.multi_reduction <add>, %0, %cst [1] : vector<16x32xf32> to vector<16xf32>
    %4 = vector.shape_cast %3 : vector<16xf32> to vector<16x1xf32>
    %cst_3 = arith.constant 3.200000e+01 : f32
    %5 = vector.broadcast %cst_3 : f32 to vector<16x1xf32>
    %6 = arith.divf %4, %5 : vector<16x1xf32>
    %7 = vector.broadcast %6 : vector<16x1xf32> to vector<16x32xf32>
    %8 = arith.subf %0, %7 : vector<16x32xf32>
    %9 = arith.mulf %8, %8 : vector<16x32xf32>
    %cst_4 = arith.constant dense<0.000000e+00> : vector<16xf32>
    %10 = vector.multi_reduction <add>, %9, %cst_4 [1] : vector<16x32xf32> to vector<16xf32>
    %11 = vector.shape_cast %10 : vector<16xf32> to vector<16x1xf32>
    %cst_5 = arith.constant 3.200000e+01 : f32
    %12 = vector.broadcast %cst_5 : f32 to vector<16x1xf32>
    %13 = arith.divf %11, %12 : vector<16x1xf32>
    %cst_6 = arith.constant 9.99999996E-13 : f32
    %14 = vector.broadcast %cst_6 : f32 to vector<16x1xf32>
    %15 = arith.addf %13, %14 : vector<16x1xf32>
    %16 = math.rsqrt %15 : vector<16x1xf32>
    %17 = vector.broadcast %16 : vector<16x1xf32> to vector<16x32xf32>
    %18 = arith.mulf %8, %17 : vector<16x32xf32>
    %19 = vector.broadcast %1 : vector<1x32xf32> to vector<16x32xf32>
    %20 = arith.mulf %18, %19 : vector<16x32xf32>
    %21 = vector.broadcast %2 : vector<1x32xf32> to vector<16x32xf32>
    %22 = arith.addf %20, %21 : vector<16x32xf32>
    %c0_7 = arith.constant 0 : index
    %c0_8 = arith.constant 0 : index
    %23 = vector.load %arg2[%c0_7, %c0_8] : memref<64x64xf32, #tpu.memory_space<vmem>>, vector<64x64xf32>
    %c0_9 = arith.constant 0 : index
    %c0_10 = arith.constant 0 : index
    %24 = vector.load %arg3[%c0_9, %c0_10] : memref<376x96xf32, #tpu.memory_space<vmem>>, vector<32x96xf32>
    %cst_11 = arith.constant dense<0.000000e+00> : vector<16x96xf32>
    %25 = tpu.matmul %22, %24, %cst_11 {dimension_numbers = #tpu.dot_dimension_numbers<[1], [0], [0], [1], [0, 0, 1, 1], [], []>} : vector<16x32xf32>, vector<32x96xf32>, vector<16x96xf32> -> vector<16x96xf32>
    %c160 = arith.constant 160 : index
    %c0_12 = arith.constant 0 : index
    %26 = vector.load %arg3[%c160, %c0_12] : memref<376x96xf32, #tpu.memory_space<vmem>>, vector<1x96xf32>
    %27 = vector.broadcast %26 : vector<1x96xf32> to vector<16x96xf32>
    %28 = arith.addf %25, %27 : vector<16x96xf32>
    %29 = vector.extract_strided_slice %28 {offsets = [0, 0], sizes = [16, 8], strides = [1, 1]} : vector<16x96xf32> to vector<16x8xf32>
    %30 = vector.extract_strided_slice %28 {offsets = [0, 8], sizes = [16, 8], strides = [1, 1]} : vector<16x96xf32> to vector<16x8xf32>
    %31 = vector.extract_strided_slice %28 {offsets = [0, 16], sizes = [16, 8], strides = [1, 1]} : vector<16x96xf32> to vector<16x8xf32>
    %32 = vector.extract_strided_slice %28 {offsets = [0, 24], sizes = [16, 8], strides = [1, 1]} : vector<16x96xf32> to vector<16x8xf32>
    %33 = tpu.concatenate %29, %30, %31, %32 in 0 : vector<16x8xf32>, vector<16x8xf32>, vector<16x8xf32>, vector<16x8xf32> -> vector<64x8xf32>
    %34 = vector.extract_strided_slice %28 {offsets = [0, 32], sizes = [16, 8], strides = [1, 1]} : vector<16x96xf32> to vector<16x8xf32>
    %35 = vector.extract_strided_slice %28 {offsets = [0, 40], sizes = [16, 8], strides = [1, 1]} : vector<16x96xf32> to vector<16x8xf32>
    %36 = vector.extract_strided_slice %28 {offsets = [0, 48], sizes = [16, 8], strides = [1, 1]} : vector<16x96xf32> to vector<16x8xf32>
    %37 = vector.extract_strided_slice %28 {offsets = [0, 56], sizes = [16, 8], strides = [1, 1]} : vector<16x96xf32> to vector<16x8xf32>
    %38 = tpu.concatenate %34, %35, %36, %37 in 0 : vector<16x8xf32>, vector<16x8xf32>, vector<16x8xf32>, vector<16x8xf32> -> vector<64x8xf32>
    %39 = vector.extract_strided_slice %28 {offsets = [0, 64], sizes = [16, 8], strides = [1, 1]} : vector<16x96xf32> to vector<16x8xf32>
    %40 = vector.extract_strided_slice %28 {offsets = [0, 72], sizes = [16, 8], strides = [1, 1]} : vector<16x96xf32> to vector<16x8xf32>
    %41 = vector.extract_strided_slice %28 {offsets = [0, 80], sizes = [16, 8], strides = [1, 1]} : vector<16x96xf32> to vector<16x8xf32>
    %42 = vector.extract_strided_slice %28 {offsets = [0, 88], sizes = [16, 8], strides = [1, 1]} : vector<16x96xf32> to vector<16x8xf32>
    %43 = tpu.concatenate %39, %40, %41, %42 in 0 : vector<16x8xf32>, vector<16x8xf32>, vector<16x8xf32>, vector<16x8xf32> -> vector<64x8xf32>
    %cst_13 = arith.constant dense<0.000000e+00> : vector<64x64xf32>
    %44 = tpu.matmul %33, %38, %cst_13 {dimension_numbers = #tpu.dot_dimension_numbers<[1], [1], [0], [0], [0, 0, 1, 0], [], []>} : vector<64x8xf32>, vector<64x8xf32>, vector<64x64xf32> -> vector<64x64xf32>
    %45 = arith.addf %44, %23 : vector<64x64xf32>
    %cst_14 = arith.constant dense<0xFF800000> : vector<64xf32>
    %46 = vector.multi_reduction <maximumf>, %45, %cst_14 [1] : vector<64x64xf32> to vector<64xf32>
    %47 = vector.shape_cast %46 : vector<64xf32> to vector<64x1xf32>
    %48 = vector.broadcast %47 : vector<64x1xf32> to vector<64x64xf32>
    %49 = arith.subf %45, %48 : vector<64x64xf32>
    %50 = math.exp %49 : vector<64x64xf32>
    %cst_15 = arith.constant dense<0.000000e+00> : vector<64xf32>
    %51 = vector.multi_reduction <add>, %50, %cst_15 [1] : vector<64x64xf32> to vector<64xf32>
    %52 = vector.shape_cast %51 : vector<64xf32> to vector<64x1xf32>
    %53 = tpu.reciprocal %52 {approx = true} : vector<64x1xf32> -> vector<64x1xf32>
    %54 = vector.broadcast %53 : vector<64x1xf32> to vector<64x64xf32>
    %55 = arith.mulf %50, %54 : vector<64x64xf32>
    %cst_16 = arith.constant dense<0.000000e+00> : vector<64x8xf32>
    %56 = tpu.matmul %55, %43, %cst_16 {dimension_numbers = #tpu.dot_dimension_numbers<[1], [0], [0], [1], [0, 0, 1, 1], [], []>} : vector<64x64xf32>, vector<64x8xf32>, vector<64x8xf32> -> vector<64x8xf32>
    %57 = vector.extract_strided_slice %56 {offsets = [0, 0], sizes = [16, 8], strides = [1, 1]} : vector<64x8xf32> to vector<16x8xf32>
    %58 = vector.extract_strided_slice %56 {offsets = [16, 0], sizes = [16, 8], strides = [1, 1]} : vector<64x8xf32> to vector<16x8xf32>
    %59 = vector.extract_strided_slice %56 {offsets = [32, 0], sizes = [16, 8], strides = [1, 1]} : vector<64x8xf32> to vector<16x8xf32>
    %60 = vector.extract_strided_slice %56 {offsets = [48, 0], sizes = [16, 8], strides = [1, 1]} : vector<64x8xf32> to vector<16x8xf32>
    %61 = tpu.concatenate %57, %58, %59, %60 in 1 : vector<16x8xf32>, vector<16x8xf32>, vector<16x8xf32>, vector<16x8xf32> -> vector<16x32xf32>
    %c128 = arith.constant 128 : index
    %c0_17 = arith.constant 0 : index
    %62 = vector.load %arg3[%c128, %c0_17] : memref<376x96xf32, #tpu.memory_space<vmem>>, vector<32x32xf32>
    %cst_18 = arith.constant dense<0.000000e+00> : vector<16x32xf32>
    %63 = tpu.matmul %61, %62, %cst_18 {dimension_numbers = #tpu.dot_dimension_numbers<[1], [0], [0], [1], [0, 0, 1, 1], [], []>} : vector<16x32xf32>, vector<32x32xf32>, vector<16x32xf32> -> vector<16x32xf32>
    %c163 = arith.constant 163 : index
    %c0_19 = arith.constant 0 : index
    %64 = vector.load %arg3[%c163, %c0_19] : memref<376x96xf32, #tpu.memory_space<vmem>>, vector<1x32xf32>
    %65 = vector.broadcast %64 : vector<1x32xf32> to vector<16x32xf32>
    %66 = arith.addf %63, %65 : vector<16x32xf32>
    %67 = arith.addf %66, %22 : vector<16x32xf32>
    %c164 = arith.constant 164 : index
    %c0_20 = arith.constant 0 : index
    %68 = vector.load %arg3[%c164, %c0_20] : memref<376x96xf32, #tpu.memory_space<vmem>>, vector<1x32xf32>
    %c165 = arith.constant 165 : index
    %c0_21 = arith.constant 0 : index
    %69 = vector.load %arg3[%c165, %c0_21] : memref<376x96xf32, #tpu.memory_space<vmem>>, vector<1x32xf32>
    %cst_22 = arith.constant dense<0.000000e+00> : vector<16xf32>
    %70 = vector.multi_reduction <add>, %67, %cst_22 [1] : vector<16x32xf32> to vector<16xf32>
    %71 = vector.shape_cast %70 : vector<16xf32> to vector<16x1xf32>
    %cst_23 = arith.constant 3.200000e+01 : f32
    %72 = vector.broadcast %cst_23 : f32 to vector<16x1xf32>
    %73 = arith.divf %71, %72 : vector<16x1xf32>
    %74 = vector.broadcast %73 : vector<16x1xf32> to vector<16x32xf32>
    %75 = arith.subf %67, %74 : vector<16x32xf32>
    %76 = arith.mulf %75, %75 : vector<16x32xf32>
    %cst_24 = arith.constant dense<0.000000e+00> : vector<16xf32>
    %77 = vector.multi_reduction <add>, %76, %cst_24 [1] : vector<16x32xf32> to vector<16xf32>
    %78 = vector.shape_cast %77 : vector<16xf32> to vector<16x1xf32>
    %cst_25 = arith.constant 3.200000e+01 : f32
    %79 = vector.broadcast %cst_25 : f32 to vector<16x1xf32>
    %80 = arith.divf %78, %79 : vector<16x1xf32>
    %cst_26 = arith.constant 9.99999996E-13 : f32
    %81 = vector.broadcast %cst_26 : f32 to vector<16x1xf32>
    %82 = arith.addf %80, %81 : vector<16x1xf32>
    %83 = math.rsqrt %82 : vector<16x1xf32>
    %84 = vector.broadcast %83 : vector<16x1xf32> to vector<16x32xf32>
    %85 = arith.mulf %75, %84 : vector<16x32xf32>
    %86 = vector.broadcast %68 : vector<1x32xf32> to vector<16x32xf32>
    %87 = arith.mulf %85, %86 : vector<16x32xf32>
    %88 = vector.broadcast %69 : vector<1x32xf32> to vector<16x32xf32>
    %89 = arith.addf %87, %88 : vector<16x32xf32>
    %c32 = arith.constant 32 : index
    %c0_27 = arith.constant 0 : index
    %90 = vector.load %arg3[%c32, %c0_27] : memref<376x96xf32, #tpu.memory_space<vmem>>, vector<32x64xf32>
    %cst_28 = arith.constant dense<0.000000e+00> : vector<16x64xf32>
    %91 = tpu.matmul %89, %90, %cst_28 {dimension_numbers = #tpu.dot_dimension_numbers<[1], [0], [0], [1], [0, 0, 1, 1], [], []>} : vector<16x32xf32>, vector<32x64xf32>, vector<16x64xf32> -> vector<16x64xf32>
    %c161 = arith.constant 161 : index
    %c0_29 = arith.constant 0 : index
    %92 = vector.load %arg3[%c161, %c0_29] : memref<376x96xf32, #tpu.memory_space<vmem>>, vector<1x64xf32>
    %93 = vector.broadcast %92 : vector<1x64xf32> to vector<16x64xf32>
    %94 = arith.addf %91, %93 : vector<16x64xf32>
    %cst_30 = arith.constant 5.000000e-01 : f32
    %95 = vector.broadcast %cst_30 : f32 to vector<16x64xf32>
    %96 = arith.mulf %95, %94 : vector<16x64xf32>
    %cst_31 = arith.constant 4.471500e-02 : f32
    %97 = vector.broadcast %cst_31 : f32 to vector<16x64xf32>
    %98 = arith.mulf %97, %94 : vector<16x64xf32>
    %99 = arith.mulf %98, %94 : vector<16x64xf32>
    %100 = arith.mulf %99, %94 : vector<16x64xf32>
    %101 = arith.addf %94, %100 : vector<16x64xf32>
    %cst_32 = arith.constant 0.797884583 : f32
    %102 = vector.broadcast %cst_32 : f32 to vector<16x64xf32>
    %103 = arith.mulf %102, %101 : vector<16x64xf32>
    %104 = math.tanh %103 : vector<16x64xf32>
    %cst_33 = arith.constant 1.000000e+00 : f32
    %105 = vector.broadcast %cst_33 : f32 to vector<16x64xf32>
    %106 = arith.addf %105, %104 : vector<16x64xf32>
    %107 = arith.mulf %96, %106 : vector<16x64xf32>
    %c64 = arith.constant 64 : index
    %c0_34 = arith.constant 0 : index
    %108 = vector.load %arg3[%c64, %c0_34] : memref<376x96xf32, #tpu.memory_space<vmem>>, vector<64x32xf32>
    %cst_35 = arith.constant dense<0.000000e+00> : vector<16x32xf32>
    %109 = tpu.matmul %107, %108, %cst_35 {dimension_numbers = #tpu.dot_dimension_numbers<[1], [0], [0], [1], [0, 0, 1, 1], [], []>} : vector<16x64xf32>, vector<64x32xf32>, vector<16x32xf32> -> vector<16x32xf32>
    %c162 = arith.constant 162 : index
    %c0_36 = arith.constant 0 : index
    %110 = vector.load %arg3[%c162, %c0_36] : memref<376x96xf32, #tpu.memory_space<vmem>>, vector<1x32xf32>
    %111 = vector.broadcast %110 : vector<1x32xf32> to vector<16x32xf32>
    %112 = arith.addf %109, %111 : vector<16x32xf32>
    %113 = arith.addf %112, %89 : vector<16x32xf32>
    %c166 = arith.constant 166 : index
    %c0_37 = arith.constant 0 : index
    %114 = vector.load %arg3[%c166, %c0_37] : memref<376x96xf32, #tpu.memory_space<vmem>>, vector<1x32xf32>
    %c167 = arith.constant 167 : index
    %c0_38 = arith.constant 0 : index
    %115 = vector.load %arg3[%c167, %c0_38] : memref<376x96xf32, #tpu.memory_space<vmem>>, vector<1x32xf32>
    %cst_39 = arith.constant dense<0.000000e+00> : vector<16xf32>
    %116 = vector.multi_reduction <add>, %113, %cst_39 [1] : vector<16x32xf32> to vector<16xf32>
    %117 = vector.shape_cast %116 : vector<16xf32> to vector<16x1xf32>
    %cst_40 = arith.constant 3.200000e+01 : f32
    %118 = vector.broadcast %cst_40 : f32 to vector<16x1xf32>
    %119 = arith.divf %117, %118 : vector<16x1xf32>
    %120 = vector.broadcast %119 : vector<16x1xf32> to vector<16x32xf32>
    %121 = arith.subf %113, %120 : vector<16x32xf32>
    %122 = arith.mulf %121, %121 : vector<16x32xf32>
    %cst_41 = arith.constant dense<0.000000e+00> : vector<16xf32>
    %123 = vector.multi_reduction <add>, %122, %cst_41 [1] : vector<16x32xf32> to vector<16xf32>
    %124 = vector.shape_cast %123 : vector<16xf32> to vector<16x1xf32>
    %cst_42 = arith.constant 3.200000e+01 : f32
    %125 = vector.broadcast %cst_42 : f32 to vector<16x1xf32>
    %126 = arith.divf %124, %125 : vector<16x1xf32>
    %cst_43 = arith.constant 9.99999996E-13 : f32
    %127 = vector.broadcast %cst_43 : f32 to vector<16x1xf32>
    %128 = arith.addf %126, %127 : vector<16x1xf32>
    %129 = math.rsqrt %128 : vector<16x1xf32>
    %130 = vector.broadcast %129 : vector<16x1xf32> to vector<16x32xf32>
    %131 = arith.mulf %121, %130 : vector<16x32xf32>
    %132 = vector.broadcast %114 : vector<1x32xf32> to vector<16x32xf32>
    %133 = arith.mulf %131, %132 : vector<16x32xf32>
    %134 = vector.broadcast %115 : vector<1x32xf32> to vector<16x32xf32>
    %135 = arith.addf %133, %134 : vector<16x32xf32>
    %c168 = arith.constant 168 : index
    %c0_44 = arith.constant 0 : index
    %136 = vector.load %arg3[%c168, %c0_44] : memref<376x96xf32, #tpu.memory_space<vmem>>, vector<32x96xf32>
    %cst_45 = arith.constant dense<0.000000e+00> : vector<16x96xf32>
    %137 = tpu.matmul %135, %136, %cst_45 {dimension_numbers = #tpu.dot_dimension_numbers<[1], [0], [0], [1], [0, 0, 1, 1], [], []>} : vector<16x32xf32>, vector<32x96xf32>, vector<16x96xf32> -> vector<16x96xf32>
    %c328 = arith.constant 328 : index
    %c0_46 = arith.constant 0 : index
    %138 = vector.load %arg3[%c328, %c0_46] : memref<376x96xf32, #tpu.memory_space<vmem>>, vector<1x96xf32>
    %139 = vector.broadcast %138 : vector<1x96xf32> to vector<16x96xf32>
    %140 = arith.addf %137, %139 : vector<16x96xf32>
    %141 = vector.extract_strided_slice %140 {offsets = [0, 0], sizes = [16, 8], strides = [1, 1]} : vector<16x96xf32> to vector<16x8xf32>
    %142 = vector.extract_strided_slice %140 {offsets = [0, 8], sizes = [16, 8], strides = [1, 1]} : vector<16x96xf32> to vector<16x8xf32>
    %143 = vector.extract_strided_slice %140 {offsets = [0, 16], sizes = [16, 8], strides = [1, 1]} : vector<16x96xf32> to vector<16x8xf32>
    %144 = vector.extract_strided_slice %140 {offsets = [0, 24], sizes = [16, 8], strides = [1, 1]} : vector<16x96xf32> to vector<16x8xf32>
    %145 = tpu.concatenate %141, %142, %143, %144 in 0 : vector<16x8xf32>, vector<16x8xf32>, vector<16x8xf32>, vector<16x8xf32> -> vector<64x8xf32>
    %146 = vector.extract_strided_slice %140 {offsets = [0, 32], sizes = [16, 8], strides = [1, 1]} : vector<16x96xf32> to vector<16x8xf32>
    %147 = vector.extract_strided_slice %140 {offsets = [0, 40], sizes = [16, 8], strides = [1, 1]} : vector<16x96xf32> to vector<16x8xf32>
    %148 = vector.extract_strided_slice %140 {offsets = [0, 48], sizes = [16, 8], strides = [1, 1]} : vector<16x96xf32> to vector<16x8xf32>
    %149 = vector.extract_strided_slice %140 {offsets = [0, 56], sizes = [16, 8], strides = [1, 1]} : vector<16x96xf32> to vector<16x8xf32>
    %150 = tpu.concatenate %146, %147, %148, %149 in 0 : vector<16x8xf32>, vector<16x8xf32>, vector<16x8xf32>, vector<16x8xf32> -> vector<64x8xf32>
    %151 = vector.extract_strided_slice %140 {offsets = [0, 64], sizes = [16, 8], strides = [1, 1]} : vector<16x96xf32> to vector<16x8xf32>
    %152 = vector.extract_strided_slice %140 {offsets = [0, 72], sizes = [16, 8], strides = [1, 1]} : vector<16x96xf32> to vector<16x8xf32>
    %153 = vector.extract_strided_slice %140 {offsets = [0, 80], sizes = [16, 8], strides = [1, 1]} : vector<16x96xf32> to vector<16x8xf32>
    %154 = vector.extract_strided_slice %140 {offsets = [0, 88], sizes = [16, 8], strides = [1, 1]} : vector<16x96xf32> to vector<16x8xf32>
    %155 = tpu.concatenate %151, %152, %153, %154 in 0 : vector<16x8xf32>, vector<16x8xf32>, vector<16x8xf32>, vector<16x8xf32> -> vector<64x8xf32>
    %cst_47 = arith.constant dense<0.000000e+00> : vector<64x64xf32>
    %156 = tpu.matmul %145, %150, %cst_47 {dimension_numbers = #tpu.dot_dimension_numbers<[1], [1], [0], [0], [0, 0, 1, 0], [], []>} : vector<64x8xf32>, vector<64x8xf32>, vector<64x64xf32> -> vector<64x64xf32>
    %157 = arith.addf %156, %23 : vector<64x64xf32>
    %cst_48 = arith.constant dense<0xFF800000> : vector<64xf32>
    %158 = vector.multi_reduction <maximumf>, %157, %cst_48 [1] : vector<64x64xf32> to vector<64xf32>
    %159 = vector.shape_cast %158 : vector<64xf32> to vector<64x1xf32>
    %160 = vector.broadcast %159 : vector<64x1xf32> to vector<64x64xf32>
    %161 = arith.subf %157, %160 : vector<64x64xf32>
    %162 = math.exp %161 : vector<64x64xf32>
    %cst_49 = arith.constant dense<0.000000e+00> : vector<64xf32>
    %163 = vector.multi_reduction <add>, %162, %cst_49 [1] : vector<64x64xf32> to vector<64xf32>
    %164 = vector.shape_cast %163 : vector<64xf32> to vector<64x1xf32>
    %165 = tpu.reciprocal %164 {approx = true} : vector<64x1xf32> -> vector<64x1xf32>
    %166 = vector.broadcast %165 : vector<64x1xf32> to vector<64x64xf32>
    %167 = arith.mulf %162, %166 : vector<64x64xf32>
    %cst_50 = arith.constant dense<0.000000e+00> : vector<64x8xf32>
    %168 = tpu.matmul %167, %155, %cst_50 {dimension_numbers = #tpu.dot_dimension_numbers<[1], [0], [0], [1], [0, 0, 1, 1], [], []>} : vector<64x64xf32>, vector<64x8xf32>, vector<64x8xf32> -> vector<64x8xf32>
    %169 = vector.extract_strided_slice %168 {offsets = [0, 0], sizes = [16, 8], strides = [1, 1]} : vector<64x8xf32> to vector<16x8xf32>
    %170 = vector.extract_strided_slice %168 {offsets = [16, 0], sizes = [16, 8], strides = [1, 1]} : vector<64x8xf32> to vector<16x8xf32>
    %171 = vector.extract_strided_slice %168 {offsets = [32, 0], sizes = [16, 8], strides = [1, 1]} : vector<64x8xf32> to vector<16x8xf32>
    %172 = vector.extract_strided_slice %168 {offsets = [48, 0], sizes = [16, 8], strides = [1, 1]} : vector<64x8xf32> to vector<16x8xf32>
    %173 = tpu.concatenate %169, %170, %171, %172 in 1 : vector<16x8xf32>, vector<16x8xf32>, vector<16x8xf32>, vector<16x8xf32> -> vector<16x32xf32>
    %c296 = arith.constant 296 : index
    %c0_51 = arith.constant 0 : index
    %174 = vector.load %arg3[%c296, %c0_51] : memref<376x96xf32, #tpu.memory_space<vmem>>, vector<32x32xf32>
    %cst_52 = arith.constant dense<0.000000e+00> : vector<16x32xf32>
    %175 = tpu.matmul %173, %174, %cst_52 {dimension_numbers = #tpu.dot_dimension_numbers<[1], [0], [0], [1], [0, 0, 1, 1], [], []>} : vector<16x32xf32>, vector<32x32xf32>, vector<16x32xf32> -> vector<16x32xf32>
    %c331 = arith.constant 331 : index
    %c0_53 = arith.constant 0 : index
    %176 = vector.load %arg3[%c331, %c0_53] : memref<376x96xf32, #tpu.memory_space<vmem>>, vector<1x32xf32>
    %177 = vector.broadcast %176 : vector<1x32xf32> to vector<16x32xf32>
    %178 = arith.addf %175, %177 : vector<16x32xf32>
    %179 = arith.addf %178, %135 : vector<16x32xf32>
    %c332 = arith.constant 332 : index
    %c0_54 = arith.constant 0 : index
    %180 = vector.load %arg3[%c332, %c0_54] : memref<376x96xf32, #tpu.memory_space<vmem>>, vector<1x32xf32>
    %c333 = arith.constant 333 : index
    %c0_55 = arith.constant 0 : index
    %181 = vector.load %arg3[%c333, %c0_55] : memref<376x96xf32, #tpu.memory_space<vmem>>, vector<1x32xf32>
    %cst_56 = arith.constant dense<0.000000e+00> : vector<16xf32>
    %182 = vector.multi_reduction <add>, %179, %cst_56 [1] : vector<16x32xf32> to vector<16xf32>
    %183 = vector.shape_cast %182 : vector<16xf32> to vector<16x1xf32>
    %cst_57 = arith.constant 3.200000e+01 : f32
    %184 = vector.broadcast %cst_57 : f32 to vector<16x1xf32>
    %185 = arith.divf %183, %184 : vector<16x1xf32>
    %186 = vector.broadcast %185 : vector<16x1xf32> to vector<16x32xf32>
    %187 = arith.subf %179, %186 : vector<16x32xf32>
    %188 = arith.mulf %187, %187 : vector<16x32xf32>
    %cst_58 = arith.constant dense<0.000000e+00> : vector<16xf32>
    %189 = vector.multi_reduction <add>, %188, %cst_58 [1] : vector<16x32xf32> to vector<16xf32>
    %190 = vector.shape_cast %189 : vector<16xf32> to vector<16x1xf32>
    %cst_59 = arith.constant 3.200000e+01 : f32
    %191 = vector.broadcast %cst_59 : f32 to vector<16x1xf32>
    %192 = arith.divf %190, %191 : vector<16x1xf32>
    %cst_60 = arith.constant 9.99999996E-13 : f32
    %193 = vector.broadcast %cst_60 : f32 to vector<16x1xf32>
    %194 = arith.addf %192, %193 : vector<16x1xf32>
    %195 = math.rsqrt %194 : vector<16x1xf32>
    %196 = vector.broadcast %195 : vector<16x1xf32> to vector<16x32xf32>
    %197 = arith.mulf %187, %196 : vector<16x32xf32>
    %198 = vector.broadcast %180 : vector<1x32xf32> to vector<16x32xf32>
    %199 = arith.mulf %197, %198 : vector<16x32xf32>
    %200 = vector.broadcast %181 : vector<1x32xf32> to vector<16x32xf32>
    %201 = arith.addf %199, %200 : vector<16x32xf32>
    %c200 = arith.constant 200 : index
    %c0_61 = arith.constant 0 : index
    %202 = vector.load %arg3[%c200, %c0_61] : memref<376x96xf32, #tpu.memory_space<vmem>>, vector<32x64xf32>
    %cst_62 = arith.constant dense<0.000000e+00> : vector<16x64xf32>
    %203 = tpu.matmul %201, %202, %cst_62 {dimension_numbers = #tpu.dot_dimension_numbers<[1], [0], [0], [1], [0, 0, 1, 1], [], []>} : vector<16x32xf32>, vector<32x64xf32>, vector<16x64xf32> -> vector<16x64xf32>
    %c329 = arith.constant 329 : index
    %c0_63 = arith.constant 0 : index
    %204 = vector.load %arg3[%c329, %c0_63] : memref<376x96xf32, #tpu.memory_space<vmem>>, vector<1x64xf32>
    %205 = vector.broadcast %204 : vector<1x64xf32> to vector<16x64xf32>
    %206 = arith.addf %203, %205 : vector<16x64xf32>
    %cst_64 = arith.constant 5.000000e-01 : f32
    %207 = vector.broadcast %cst_64 : f32 to vector<16x64xf32>
    %208 = arith.mulf %207, %206 : vector<16x64xf32>
    %cst_65 = arith.constant 4.471500e-02 : f32
    %209 = vector.broadcast %cst_65 : f32 to vector<16x64xf32>
    %210 = arith.mulf %209, %206 : vector<16x64xf32>
    %211 = arith.mulf %210, %206 : vector<16x64xf32>
    %212 = arith.mulf %211, %206 : vector<16x64xf32>
    %213 = arith.addf %206, %212 : vector<16x64xf32>
    %cst_66 = arith.constant 0.797884583 : f32
    %214 = vector.broadcast %cst_66 : f32 to vector<16x64xf32>
    %215 = arith.mulf %214, %213 : vector<16x64xf32>
    %216 = math.tanh %215 : vector<16x64xf32>
    %cst_67 = arith.constant 1.000000e+00 : f32
    %217 = vector.broadcast %cst_67 : f32 to vector<16x64xf32>
    %218 = arith.addf %217, %216 : vector<16x64xf32>
    %219 = arith.mulf %208, %218 : vector<16x64xf32>
    %c232 = arith.constant 232 : index
    %c0_68 = arith.constant 0 : index
    %220 = vector.load %arg3[%c232, %c0_68] : memref<376x96xf32, #tpu.memory_space<vmem>>, vector<64x32xf32>
    %cst_69 = arith.constant dense<0.000000e+00> : vector<16x32xf32>
    %221 = tpu.matmul %219, %220, %cst_69 {dimension_numbers = #tpu.dot_dimension_numbers<[1], [0], [0], [1], [0, 0, 1, 1], [], []>} : vector<16x64xf32>, vector<64x32xf32>, vector<16x32xf32> -> vector<16x32xf32>
    %c330 = arith.constant 330 : index
    %c0_70 = arith.constant 0 : index
    %222 = vector.load %arg3[%c330, %c0_70] : memref<376x96xf32, #tpu.memory_space<vmem>>, vector<1x32xf32>
    %223 = vector.broadcast %222 : vector<1x32xf32> to vector<16x32xf32>
    %224 = arith.addf %221, %223 : vector<16x32xf32>
    %225 = arith.addf %224, %201 : vector<16x32xf32>
    %c334 = arith.constant 334 : index
    %c0_71 = arith.constant 0 : index
    %226 = vector.load %arg3[%c334, %c0_71] : memref<376x96xf32, #tpu.memory_space<vmem>>, vector<1x32xf32>
    %c335 = arith.constant 335 : index
    %c0_72 = arith.constant 0 : index
    %227 = vector.load %arg3[%c335, %c0_72] : memref<376x96xf32, #tpu.memory_space<vmem>>, vector<1x32xf32>
    %cst_73 = arith.constant dense<0.000000e+00> : vector<16xf32>
    %228 = vector.multi_reduction <add>, %225, %cst_73 [1] : vector<16x32xf32> to vector<16xf32>
    %229 = vector.shape_cast %228 : vector<16xf32> to vector<16x1xf32>
    %cst_74 = arith.constant 3.200000e+01 : f32
    %230 = vector.broadcast %cst_74 : f32 to vector<16x1xf32>
    %231 = arith.divf %229, %230 : vector<16x1xf32>
    %232 = vector.broadcast %231 : vector<16x1xf32> to vector<16x32xf32>
    %233 = arith.subf %225, %232 : vector<16x32xf32>
    %234 = arith.mulf %233, %233 : vector<16x32xf32>
    %cst_75 = arith.constant dense<0.000000e+00> : vector<16xf32>
    %235 = vector.multi_reduction <add>, %234, %cst_75 [1] : vector<16x32xf32> to vector<16xf32>
    %236 = vector.shape_cast %235 : vector<16xf32> to vector<16x1xf32>
    %cst_76 = arith.constant 3.200000e+01 : f32
    %237 = vector.broadcast %cst_76 : f32 to vector<16x1xf32>
    %238 = arith.divf %236, %237 : vector<16x1xf32>
    %cst_77 = arith.constant 9.99999996E-13 : f32
    %239 = vector.broadcast %cst_77 : f32 to vector<16x1xf32>
    %240 = arith.addf %238, %239 : vector<16x1xf32>
    %241 = math.rsqrt %240 : vector<16x1xf32>
    %242 = vector.broadcast %241 : vector<16x1xf32> to vector<16x32xf32>
    %243 = arith.mulf %233, %242 : vector<16x32xf32>
    %244 = vector.broadcast %226 : vector<1x32xf32> to vector<16x32xf32>
    %245 = arith.mulf %243, %244 : vector<16x32xf32>
    %246 = vector.broadcast %227 : vector<1x32xf32> to vector<16x32xf32>
    %247 = arith.addf %245, %246 : vector<16x32xf32>
    %248 = vector.extract_strided_slice %247 {offsets = [0, 0], sizes = [1, 32], strides = [1, 1]} : vector<16x32xf32> to vector<1x32xf32>
    %249 = vector.extract_strided_slice %247 {offsets = [8, 0], sizes = [1, 32], strides = [1, 1]} : vector<16x32xf32> to vector<1x32xf32>
    %250 = tpu.concatenate %248, %249 in 0 : vector<1x32xf32>, vector<1x32xf32> -> vector<2x32xf32>
    %c336 = arith.constant 336 : index
    %c0_78 = arith.constant 0 : index
    %251 = vector.load %arg3[%c336, %c0_78] : memref<376x96xf32, #tpu.memory_space<vmem>>, vector<32x32xf32>
    %cst_79 = arith.constant dense<0.000000e+00> : vector<2x32xf32>
    %252 = tpu.matmul %250, %251, %cst_79 {dimension_numbers = #tpu.dot_dimension_numbers<[1], [0], [0], [1], [0, 0, 1, 1], [], []>} : vector<2x32xf32>, vector<32x32xf32>, vector<2x32xf32> -> vector<2x32xf32>
    %c370 = arith.constant 370 : index
    %c0_80 = arith.constant 0 : index
    %253 = vector.load %arg3[%c370, %c0_80] : memref<376x96xf32, #tpu.memory_space<vmem>>, vector<1x32xf32>
    %254 = vector.broadcast %253 : vector<1x32xf32> to vector<2x32xf32>
    %255 = arith.addf %252, %254 : vector<2x32xf32>
    %256 = math.tanh %255 : vector<2x32xf32>
    %c0_81 = arith.constant 0 : index
    %c0_82 = arith.constant 0 : index
    %257 = vector.load %arg4[%c0_81, %c0_82] : memref<40x256xf32, #tpu.memory_space<vmem>>, vector<32x256xf32>
    %cst_83 = arith.constant dense<0.000000e+00> : vector<2x256xf32>
    %258 = tpu.matmul %256, %257, %cst_83 {dimension_numbers = #tpu.dot_dimension_numbers<[1], [0], [0], [1], [0, 0, 1, 1], [], []>} : vector<2x32xf32>, vector<32x256xf32>, vector<2x256xf32> -> vector<2x256xf32>
    %c32_84 = arith.constant 32 : index
    %c0_85 = arith.constant 0 : index
    %259 = vector.load %arg4[%c32_84, %c0_85] : memref<40x256xf32, #tpu.memory_space<vmem>>, vector<1x256xf32>
    %260 = vector.broadcast %259 : vector<1x256xf32> to vector<2x256xf32>
    %261 = arith.addf %258, %260 : vector<2x256xf32>
    %cst_86 = arith.constant 0.000000e+00 : f32
    %262 = vector.broadcast %cst_86 : f32 to vector<2x256xf32>
    %263 = arith.maximumf %261, %262 : vector<2x256xf32>
    %c33 = arith.constant 33 : index
    %c0_87 = arith.constant 0 : index
    %264 = vector.load %arg4[%c33, %c0_87] : memref<40x256xf32, #tpu.memory_space<vmem>>, vector<2x256xf32>
    %cst_88 = arith.constant dense<0.000000e+00> : vector<2x2xf32>
    %265 = tpu.matmul %263, %264, %cst_88 {dimension_numbers = #tpu.dot_dimension_numbers<[1], [1], [0], [0], [0, 0, 1, 0], [], []>} : vector<2x256xf32>, vector<2x256xf32>, vector<2x2xf32> -> vector<2x2xf32>
    %c35 = arith.constant 35 : index
    %c0_89 = arith.constant 0 : index
    %266 = vector.load %arg4[%c35, %c0_89] : memref<40x256xf32, #tpu.memory_space<vmem>>, vector<1x2xf32>
    %267 = vector.broadcast %266 : vector<1x2xf32> to vector<2x2xf32>
    %268 = arith.addf %265, %267 : vector<2x2xf32>
    %cst_90 = arith.constant 0.000000e+00 : f32
    %269 = vector.broadcast %cst_90 : f32 to vector<2x126xf32>
    %270 = tpu.concatenate %268, %269 in 1 : vector<2x2xf32>, vector<2x126xf32> -> vector<2x128xf32>
    %c0_91 = arith.constant 0 : index
    %c0_92 = arith.constant 0 : index
    %271 = vector.load %arg5[%c0_91, %c0_92] : memref<2x128xf32, #tpu.memory_space<vmem>>, vector<2x128xf32>
    tpu.vector_store %arg5[%c0_91, %c0_92], %270 {strides = array<i32>} : memref<2x128xf32, #tpu.memory_space<vmem>>, vector<2x128xf32>,
    return
  }
  func.func @transform_0(%arg0: i32) -> (i32, i32) {
    %c0_i32 = arith.constant 0 : i32
    %c0_i32_0 = arith.constant 0 : i32
    %c0_i32_1 = arith.constant 0 : i32
    return %c0_i32, %c0_i32_0 : i32, i32
  }
  func.func @transform_1(%arg0: i32) -> (i32, i32) {
    %c0_i32 = arith.constant 0 : i32
    %c0_i32_0 = arith.constant 0 : i32
    %c0_i32_1 = arith.constant 0 : i32
    return %c0_i32, %c0_i32_0 : i32, i32
  }
  func.func @transform_2(%arg0: i32) -> (i32, i32) {
    %c0_i32 = arith.constant 0 : i32
    %c0_i32_0 = arith.constant 0 : i32
    %c0_i32_1 = arith.constant 0 : i32
    return %c0_i32, %c0_i32_0 : i32, i32
  }
  func.func @transform_3(%arg0: i32) -> (i32, i32) {
    %c0_i32 = arith.constant 0 : i32
    %c0_i32_0 = arith.constant 0 : i32
    %c0_i32_1 = arith.constant 0 : i32
    return %c0_i32, %c0_i32_0 : i32, i32
  }
  func.func @transform_4(%arg0: i32) -> (i32, i32) {
    %c0_i32 = arith.constant 0 : i32
    %c0_i32_0 = arith.constant 0 : i32
    %c0_i32_1 = arith.constant 0 : i32
    return %c0_i32, %c0_i32_0 : i32, i32
  }
}

</mosaic_0001>

<llo_original>
// kernel: tile.8
$region0: #{tile.8}
  #allocation0 [shape = 's32[1]{0}', space=sflag, size = 0x4, scoped, tag = 'scoped memory for tile.8']
  %s0 = inlined_call_operand.vmem [shape: pred[16], index: 0, kind: input, shape index: {}]
  %s1 = inlined_call_operand.vmem [shape: pred[4,16], index: 1, kind: output, shape index: {}]
  // Predicated region
  $region2: #{tile.8} parent=0 // pred_check
    _
  $region3: #{tile.8} parent=0 // pred_check_branch
    %3 = sbr.rel (0) target = $region5
  $region4: #{tile.8} parent=0 // pred_region
    _
  $region5: #{tile.8} parent=0 // pred_fallthru
    _
  %v4 = vld [vmem:[%s0] ss:$0 sm:$0xff]
  %v6 = vshra.s32 %v4, 0
  %v7 = vand.u32 %v6, 255
  %v8 = vpack.c.b16 0, %v7
  %v9 = vpack.c.b8 0, %v8
  %11 = vst [vmem:[%s1] sm:$0x1] %v9

// kernel: forward.1
$region0: #{forward.1}
  #allocation0 [shape = 'u32[]', space=smem, size = 0x4, offset = 0x4, fixed_abs, tag = 'smem constant byte address 0x4 - core index']
  #allocation1 [shape = 'u32[144,128]{1,0:T(1,128)}', space=vmem, size = 0x12000, scoped, tag = 'internal scratch']
  %s0 = inlined_call_operand.vmem [shape: f32[16,32], index: 0, kind: input, shape index: {}]
  %s1 = inlined_call_operand.vmem [shape: f32[64,64], index: 1, kind: input, shape index: {}]
  %s2 = inlined_call_operand.vmem [shape: f32[376,96], index: 2, kind: input, shape index: {}]
  %s3 = inlined_call_operand.vmem [shape: f32[40,256], index: 3, kind: input, shape index: {}]
  %s4 = inlined_call_operand.hbm [shape: f32[2,128], index: 4, kind: output, shape index: {}]
  %s5 = sld [smem:[#allocation0]]
  $region26: #{forward.1} parent=0
    _
  %s7 = ssub.s32 1, %s5
  %s8 = scalar_select 0, %s7, %s5
  $region1: #{forward.1} parent=0
    #allocation2 [shape = 'u8[1024]{0}', space=vmem, size = 0x400, scoped, tag = 'output window, operand 0, single buffered']
    #allocation3 [shape = 's32[1]{0}', space=sflag, size = 0x4, scoped, tag = 'scoped memory for forward.1']
    %9 = vsyncpa [#allocation3], 0
    // Predicated region
    $region2: #{forward.1} parent=1 // pred_check
      _
    $region3: #{forward.1} parent=1 // pred_check_branch
      %11 = sbr.rel (0) target = $region5
    $region4: #{forward.1} parent=1 // pred_region
      _
    $region5: #{forward.1} parent=1 // pred_fallthru
      _
    // Predicated region
    $region6: #{forward.1} parent=1 // pred_check
      _
    $region7: #{forward.1} parent=1 // pred_check_branch
      %13 = sbr.rel (0) target = $region9
    $region8: #{forward.1} parent=1 // pred_region
      _
    $region9: #{forward.1} parent=1 // pred_fallthru
      _
    // Predicated region
    $region10: #{forward.1} parent=1 // pred_check
      _
    $region11: #{forward.1} parent=1 // pred_check_branch
      %15 = sbr.rel (0) target = $region13
    $region12: #{forward.1} parent=1 // pred_region
      _
    $region13: #{forward.1} parent=1 // pred_fallthru
      _
    // Predicated region
    $region14: #{forward.1} parent=1 // pred_check
      _
    $region15: #{forward.1} parent=1 // pred_check_branch
      %17 = sbr.rel (0) target = $region17
    $region16: #{forward.1} parent=1 // pred_region
      _
    $region17: #{forward.1} parent=1 // pred_fallthru
      _
    %v18 = vld [vmem:[%s0] sm:$0xff]
    %v19 = vld [vmem:[%s0 + $0x8] sm:$0xff]
    %v20 = vld [vmem:[%s2 + $0x170] sm:$0x1]
    %v21 = vld [vmem:[%s2 + $0x171] sm:$0x1]
    %vm22 = vcmask 261120
    %v23 = vsel %vm22, %v18, 0.0
    %24 = vadd.xlane.f32.xlu0 %v23
    %v25 = vpop.xlane.xlu0 %24
    %v26 = vsel %vm22, %v19, 0.0
    %27 = vadd.xlane.f32.xlu0 %v26
    %v28 = vpop.xlane.xlu0 %27
    %v29 = vrcp.pop 32.0
    %v30 = vmul.f32 %v25, %v29
    %v31 = vmul.f32 %v28, %v29
    %v32 = vsub.f32 %v18, %v30
    %v33 = vsub.f32 %v19, %v31
    %v34 = vmul.f32 %v32, %v32
    %v35 = vmul.f32 %v33, %v33
    %v36 = vsel %vm22, %v34, 0.0
    %37 = vadd.xlane.f32.xlu0 %v36
    %v38 = vpop.xlane.xlu0 %37
    %v39 = vsel %vm22, %v35, 0.0
    %40 = vadd.xlane.f32.xlu0 %v39
    %v41 = vpop.xlane.xlu0 %40
    %v42 = vmul.f32 %v38, %v29
    %v43 = vmul.f32 %v41, %v29
    %v44 = vadd.f32 %v42, 1e-12
    %v45 = vadd.f32 %v43, 1e-12
    %v46 = vrsqrt.pop %v44
    %v47 = vrsqrt.pop %v45
    %v48 = vmul.f32 %v32, %v46
    %v49 = vmul.f32 %v33, %v47
    %v50 = vlaneseq
    %v51 = vshrl.u32 %v50, 7
    %v52 = vsub.s32 0, %v51
    %v53 = vrot.slane %v20, %v52
    %v54 = vmul.f32 %v48, %v53
    %v55 = vmul.f32 %v49, %v53
    %v56 = vlaneseq
    %v57 = vshrl.u32 %v56, 7
    %v58 = vsub.s32 0, %v57
    %v59 = vrot.slane %v21, %v58
    %v60 = vadd.f32 %v54, %v59
    %v61 = vadd.f32 %v55, %v59
    %v62 = vld [vmem:[%s1] sm:$0xff]
    %v63 = vld [vmem:[%s1 + $0x8] sm:$0xff]
    %v64 = vld [vmem:[%s1 + $0x10] sm:$0xff]
    %v65 = vld [vmem:[%s1 + $0x18] sm:$0xff]
    %v66 = vld [vmem:[%s1 + $0x20] sm:$0xff]
    %v67 = vld [vmem:[%s1 + $0x28] sm:$0xff]
    %v68 = vld [vmem:[%s1 + $0x30] sm:$0xff]
    %v69 = vld [vmem:[%s1 + $0x38] sm:$0xff]
    %v70 = vld [vmem:[%s2] sm:$0xff]
    %v71 = vld [vmem:[%s2 + $0x8] sm:$0xff]
    %v72 = vld [vmem:[%s2 + $0x10] sm:$0xff]
    %v73 = vld [vmem:[%s2 + $0x18] sm:$0xff]
    %v74 = vld [vmem:[%s2 + $0xa0] sm:$0x1]
    %v75 = vlaneseq
    %v76 = vshrl.u32 %v75, 7
    %v77 = vsub.s32 0, %v76
    %v78 = vrot.slane %v74, %v77
    %v80 = vsel %vm22, %v60, 0
    %v83 = vsel %vm22, %v61, 0
    %85 = vmatprep.subr.mxu0 0.0
    %86 = vmatpush1.msra.mxu0 %v70
    %87 = vmatprep.subr.mxu0 0.0
    %88 = vmatpush1.msra.mxu0 %v71
    %89 = vmatprep.subr.mxu0 0.0
    %90 = vmatpush1.msra.mxu0 %v72
    %91 = vmatprep.subr.mxu0 0.0
    %92 = vmatpush1.msra.mxu0 %v73
    %93 = vmatprep.subr.mxu0 0.0
    %94 = vmatpush1.msra.mxu0 0.0
    %95 = vmatprep.subr.mxu0 0.0
    %96 = vmatpush1.msra.mxu0 0.0
    %97 = vmatprep.subr.mxu0 0.0
    %98 = vmatpush1.msra.mxu0 0.0
    %99 = vmatprep.subr.mxu0 0.0
    %100 = vmatpush1.msra.mxu0 0.0
    %101 = vmatprep.subr.mxu0 0.0
    %102 = vmatpush1.msra.mxu0 0.0
    %103 = vmatprep.subr.mxu0 0.0
    %104 = vmatpush1.msra.mxu0 0.0
    %105 = vmatprep.subr.mxu0 0.0
    %106 = vmatpush1.msra.mxu0 0.0
    %107 = vmatprep.subr.mxu0 0.0
    %108 = vmatpush1.msra.mxu0 0.0
    %109 = vmatprep.subr.mxu0 0.0
    %110 = vmatpush1.msra.mxu0 0.0
    %111 = vmatprep.subr.mxu0 0.0
    %112 = vmatpush1.msra.mxu0 0.0
    %113 = vmatprep.subr.mxu0 0.0
    %114 = vmatpush1.msra.mxu0 0.0
    %115 = vmatprep.subr.mxu0 0.0
    %116 = vmatpush1.msra.mxu0 0.0
    %117 = vmatprep.subr.mxu0 0.0
    %118 = vmatpush1.msra.mxu0 0.0
    %119 = vmatprep.subr.mxu0 0.0
    %120 = vmatpush1.msra.mxu0 0.0
    %121 = vmatprep.subr.mxu0 0.0
    %122 = vmatpush1.msra.mxu0 0.0
    %123 = vmatprep.subr.mxu0 0.0
    %124 = vmatpush1.msra.mxu0 0.0
    %125 = vmatprep.subr.mxu0 0.0
    %126 = vmatpush1.msra.mxu0 0.0
    %127 = vmatprep.subr.mxu0 0.0
    %128 = vmatpush1.msra.mxu0 0.0
    %129 = vmatprep.subr.mxu0 0.0
    %130 = vmatpush1.msra.mxu0 0.0
    %131 = vmatprep.subr.mxu0 0.0
    %132 = vmatpush1.msra.mxu0 0.0
    %133 = vmatprep.subr.mxu0 0.0
    %134 = vmatpush1.msra.mxu0 0.0
    %135 = vmatprep.subr.mxu0 0.0
    %136 = vmatpush1.msra.mxu0 0.0
    %137 = vmatprep.subr.mxu0 0.0
    %138 = vmatpush1.msra.mxu0 0.0
    %139 = vmatprep.subr.mxu0 0.0
    %140 = vmatpush1.msra.mxu0 0.0
    %141 = vmatprep.subr.mxu0 0.0
    %142 = vmatpush1.msra.mxu0 0.0
    %143 = vmatprep.subr.mxu0 0.0
    %144 = vmatpush1.msra.mxu0 0.0
    %145 = vmatprep.subr.mxu0 0.0
    %146 = vmatpush1.msra.mxu0 0.0
    %147 = vmatprep.subr.mxu0 0.0
    %148 = vmatpush1.msra.mxu0 0.0
    %149 = vmatprep.mubr.f32.mxu0 0.0
    %150 = vmatmul.mubr.f32.gmra.mrb[0].mxu0 %v80
    %v151 = vpop.f32.mrb[0].mxu0
    %v152 = vadd.f32 %v78, %v151
    %v153 = vpop.f32.mrb[0].mxu0
    %154 = vmatprep.mubr.f32.mxu0 0.0
    %155 = vmatmul.mubr.f32.gmra.mrb[0].mxu0 %v83
    %v156 = vpop.f32.mrb[0].mxu0
    %v157 = vadd.f32 %v78, %v156
    %v158 = vpop.f32.mrb[0].mxu0
    %159 = vdwg.mxu0
    %162 = vrot.lane.b32.xlu0 %v152, 120
    %v163 = vpop.permute.xlu0 %162
    %164 = vrot.lane.b32.xlu0 %v157, 120
    %v165 = vpop.permute.xlu0 %164
    %166 = vrot.lane.b32.xlu0 %v152, 112
    %v167 = vpop.permute.xlu0 %166
    %168 = vrot.lane.b32.xlu0 %v157, 112
    %v169 = vpop.permute.xlu0 %168
    %170 = vrot.lane.b32.xlu0 %v152, 104
    %v171 = vpop.permute.xlu0 %170
    %172 = vrot.lane.b32.xlu0 %v157, 104
    %v173 = vpop.permute.xlu0 %172
    %174 = vrot.lane.b32.xlu0 %v152, 96
    %v175 = vpop.permute.xlu0 %174
    %176 = vrot.lane.b32.xlu0 %v157, 96
    %v177 = vpop.permute.xlu0 %176
    %178 = vrot.lane.b32.xlu0 %v163, 96
    %v179 = vpop.permute.xlu0 %178
    %180 = vrot.lane.b32.xlu0 %v165, 96
    %v181 = vpop.permute.xlu0 %180
    %182 = vrot.lane.b32.xlu0 %v167, 96
    %v183 = vpop.permute.xlu0 %182
    %184 = vrot.lane.b32.xlu0 %v169, 96
    %v185 = vpop.permute.xlu0 %184
    %186 = vrot.lane.b32.xlu0 %v171, 96
    %v187 = vpop.permute.xlu0 %186
    %188 = vrot.lane.b32.xlu0 %v173, 96
    %v189 = vpop.permute.xlu0 %188
    %vm190 = vcmask 64512
    %v191 = vsel %vm190, %v152, 0
    %v193 = vsel %vm190, %v157, 0
    %v195 = vsel %vm190, %v163, 0
    %v197 = vsel %vm190, %v165, 0
    %v199 = vsel %vm190, %v167, 0
    %v201 = vsel %vm190, %v169, 0
    %v203 = vsel %vm190, %v171, 0
    %v205 = vsel %vm190, %v173, 0
    %v207 = vsel %vm190, %v175, 0
    %v209 = vsel %vm190, %v177, 0
    %v211 = vsel %vm190, %v179, 0
    %v213 = vsel %vm190, %v181, 0
    %v215 = vsel %vm190, %v183, 0
    %v217 = vsel %vm190, %v185, 0
    %v219 = vsel %vm190, %v187, 0
    %v221 = vsel %vm190, %v189, 0
    %223 = vmatprep.subr.mxu0 0.0
    %224 = vmatpush1.xpose.msra.mxu0 %v207
    %225 = vmatprep.subr.mxu0 0.0
    %226 = vmatpush1.xpose.msra.mxu0 %v209
    %227 = vmatprep.subr.mxu0 0.0
    %228 = vmatpush1.xpose.msra.mxu0 %v211
    %229 = vmatprep.subr.mxu0 0.0
    %230 = vmatpush1.xpose.msra.mxu0 %v213
    %231 = vmatprep.subr.mxu0 0.0
    %232 = vmatpush1.xpose.msra.mxu0 %v215
    %233 = vmatprep.subr.mxu0 0.0
    %234 = vmatpush1.xpose.msra.mxu0 %v217
    %235 = vmatprep.subr.mxu0 0.0
    %236 = vmatpush1.xpose.msra.mxu0 %v219
    %237 = vmatprep.subr.mxu0 0.0
    %238 = vmatpush1.xpose.msra.mxu0 %v221
    %239 = vmatprep.subr.mxu0 0.0
    %240 = vmatpush1.xpose.msra.mxu0 0.0
    %241 = vmatprep.subr.mxu0 0.0
    %242 = vmatpush1.xpose.msra.mxu0 0.0
    %243 = vmatprep.subr.mxu0 0.0
    %244 = vmatpush1.xpose.msra.mxu0 0.0
    %245 = vmatprep.subr.mxu0 0.0
    %246 = vmatpush1.xpose.msra.mxu0 0.0
    %247 = vmatprep.subr.mxu0 0.0
    %248 = vmatpush1.xpose.msra.mxu0 0.0
    %249 = vmatprep.subr.mxu0 0.0
    %250 = vmatpush1.xpose.msra.mxu0 0.0
    %251 = vmatprep.subr.mxu0 0.0
    %252 = vmatpush1.xpose.msra.mxu0 0.0
    %253 = vmatprep.subr.mxu0 0.0
    %254 = vmatpush1.xpose.msra.mxu0 0.0
    %255 = vmatprep.subr.mxu0 0.0
    %256 = vmatpush1.xpose.msra.mxu0 0.0
    %257 = vmatprep.subr.mxu0 0.0
    %258 = vmatpush1.xpose.msra.mxu0 0.0
    %259 = vmatprep.subr.mxu0 0.0
    %260 = vmatpush1.xpose.msra.mxu0 0.0
    %261 = vmatprep.subr.mxu0 0.0
    %262 = vmatpush1.xpose.msra.mxu0 0.0
    %263 = vmatprep.subr.mxu0 0.0
    %264 = vmatpush1.xpose.msra.mxu0 0.0
    %265 = vmatprep.subr.mxu0 0.0
    %266 = vmatpush1.xpose.msra.mxu0 0.0
    %267 = vmatprep.subr.mxu0 0.0
    %268 = vmatpush1.xpose.msra.mxu0 0.0
    %269 = vmatprep.subr.mxu0 0.0
    %270 = vmatpush1.xpose.msra.mxu0 0.0
    %271 = vmatprep.subr.mxu0 0.0
    %272 = vmatpush1.xpose.msra.mxu0 0.0
    %273 = vmatprep.subr.mxu0 0.0
    %274 = vmatpush1.xpose.msra.mxu0 0.0
    %275 = vmatprep.subr.mxu0 0.0
    %276 = vmatpush1.xpose.msra.mxu0 0.0
    %277 = vmatprep.subr.mxu0 0.0
    %278 = vmatpush1.xpose.msra.mxu0 0.0
    %279 = vmatprep.subr.mxu0 0.0
    %280 = vmatpush1.xpose.msra.mxu0 0.0
    %281 = vmatprep.subr.mxu0 0.0
    %282 = vmatpush1.xpose.msra.mxu0 0.0
    %283 = vmatprep.subr.mxu0 0.0
    %284 = vmatpush1.xpose.msra.mxu0 0.0
    %285 = vmatprep.subr.mxu0 0.0
    %286 = vmatpush1.xpose.msra.mxu0 0.0
    %287 = vmatprep.mubr.f32.mxu0 0.0
    %288 = vmatmul.mubr.f32.gmra.mrb[0].mxu0 %v191
    %v289 = vpop.f32.mrb[0].mxu0
    %v290 = vadd.f32 %v62, %v289
    %v291 = vpop.f32.mrb[0].mxu0
    %292 = vmatprep.mubr.f32.mxu0 0.0
    %293 = vmatmul.mubr.f32.gmra.mrb[0].mxu0 %v193
    %v294 = vpop.f32.mrb[0].mxu0
    %v295 = vadd.f32 %v63, %v294
    %v296 = vpop.f32.mrb[0].mxu0
    %297 = vmatprep.mubr.f32.mxu0 0.0
    %298 = vmatmul.mubr.f32.gmra.mrb[0].mxu0 %v195
    %v299 = vpop.f32.mrb[0].mxu0
    %v300 = vadd.f32 %v64, %v299
    %v301 = vpop.f32.mrb[0].mxu0
    %302 = vmatprep.mubr.f32.mxu0 0.0
    %303 = vmatmul.mubr.f32.gmra.mrb[0].mxu0 %v197
    %v304 = vpop.f32.mrb[0].mxu0
    %v305 = vadd.f32 %v65, %v304
    %v306 = vpop.f32.mrb[0].mxu0
    %307 = vmatprep.mubr.f32.mxu0 0.0
    %308 = vmatmul.mubr.f32.gmra.mrb[0].mxu0 %v199
    %v309 = vpop.f32.mrb[0].mxu0
    %v310 = vadd.f32 %v66, %v309
    %v311 = vpop.f32.mrb[0].mxu0
    %312 = vmatprep.mubr.f32.mxu0 0.0
    %313 = vmatmul.mubr.f32.gmra.mrb[0].mxu0 %v201
    %v314 = vpop.f32.mrb[0].mxu0
    %v315 = vadd.f32 %v67, %v314
    %v316 = vpop.f32.mrb[0].mxu0
    %317 = vmatprep.mubr.f32.mxu0 0.0
    %318 = vmatmul.mubr.f32.gmra.mrb[0].mxu0 %v203
    %v319 = vpop.f32.mrb[0].mxu0
    %v320 = vadd.f32 %v68, %v319
    %v321 = vpop.f32.mrb[0].mxu0
    %322 = vmatprep.mubr.f32.mxu0 0.0
    %323 = vmatmul.mubr.f32.gmra.mrb[0].mxu0 %v205
    %v324 = vpop.f32.mrb[0].mxu0
    %v325 = vadd.f32 %v69, %v324
    %v326 = vpop.f32.mrb[0].mxu0
    %327 = vdwg.mxu0
    %vm328 = vcmask 523264
    %v329 = vsel %vm328, %v290, -inf
    %330 = vmax.xlane.f32.xlu0 %v329
    %v331 = vpop.xlane.xlu0 %330
    %v332 = vsel %vm328, %v295, -inf
    %333 = vmax.xlane.f32.xlu0 %v332
    %v334 = vpop.xlane.xlu0 %333
    %v335 = vsel %vm328, %v300, -inf
    %336 = vmax.xlane.f32.xlu0 %v335
    %v337 = vpop.xlane.xlu0 %336
    %v338 = vsel %vm328, %v305, -inf
    %339 = vmax.xlane.f32.xlu0 %v338
    %v340 = vpop.xlane.xlu0 %339
    %v341 = vsel %vm328, %v310, -inf
    %342 = vmax.xlane.f32.xlu0 %v341
    %v343 = vpop.xlane.xlu0 %342
    %v344 = vsel %vm328, %v315, -inf
    %345 = vmax.xlane.f32.xlu0 %v344
    %v346 = vpop.xlane.xlu0 %345
    %v347 = vsel %vm328, %v320, -inf
    %348 = vmax.xlane.f32.xlu0 %v347
    %v349 = vpop.xlane.xlu0 %348
    %v350 = vsel %vm328, %v325, -inf
    %351 = vmax.xlane.f32.xlu0 %v350
    %v352 = vpop.xlane.xlu0 %351
    %v353 = vsub.f32 %v290, %v331
    %v354 = vsub.f32 %v295, %v334
    %v355 = vsub.f32 %v300, %v337
    %v356 = vsub.f32 %v305, %v340
    %v357 = vsub.f32 %v310, %v343
    %v358 = vsub.f32 %v315, %v346
    %v359 = vsub.f32 %v320, %v349
    %v360 = vsub.f32 %v325, %v352
    %v361 = vmul.f32 %v353, 1.442695
    %v362 = vpow.pop %v361
    %v363 = vmul.f32 %v354, 1.442695
    %v364 = vpow.pop %v363
    %v365 = vmul.f32 %v355, 1.442695
    %v366 = vpow.pop %v365
    %v367 = vmul.f32 %v356, 1.442695
    %v368 = vpow.pop %v367
    %v369 = vmul.f32 %v357, 1.442695
    %v370 = vpow.pop %v369
    %v371 = vmul.f32 %v358, 1.442695
    %v372 = vpow.pop %v371
    %v373 = vmul.f32 %v359, 1.442695
    %v374 = vpow.pop %v373
    %v375 = vmul.f32 %v360, 1.442695
    %v376 = vpow.pop %v375
    %v377 = vsel %vm328, %v362, 0.0
    %378 = vadd.xlane.f32.xlu0 %v377
    %v379 = vpop.xlane.xlu0 %378
    %v380 = vsel %vm328, %v364, 0.0
    %381 = vadd.xlane.f32.xlu0 %v380
    %v382 = vpop.xlane.xlu0 %381
    %v383 = vsel %vm328, %v366, 0.0
    %384 = vadd.xlane.f32.xlu0 %v383
    %v385 = vpop.xlane.xlu0 %384
    %v386 = vsel %vm328, %v368, 0.0
    %387 = vadd.xlane.f32.xlu0 %v386
    %v388 = vpop.xlane.xlu0 %387
    %v389 = vsel %vm328, %v370, 0.0
    %390 = vadd.xlane.f32.xlu0 %v389
    %v391 = vpop.xlane.xlu0 %390
    %v392 = vsel %vm328, %v372, 0.0
    %393 = vadd.xlane.f32.xlu0 %v392
    %v394 = vpop.xlane.xlu0 %393
    %v395 = vsel %vm328, %v374, 0.0
    %396 = vadd.xlane.f32.xlu0 %v395
    %v397 = vpop.xlane.xlu0 %396
    %v398 = vsel %vm328, %v376, 0.0
    %399 = vadd.xlane.f32.xlu0 %v398
    %v400 = vpop.xlane.xlu0 %399
    %v401 = vrcp.pop %v379
    %v402 = vrcp.pop %v382
    %v403 = vrcp.pop %v385
    %v404 = vrcp.pop %v388
    %v405 = vrcp.pop %v391
    %v406 = vrcp.pop %v394
    %v407 = vrcp.pop %v397
    %v408 = vrcp.pop %v400
    %v409 = vmul.f32 %v362, %v401
    %v410 = vmul.f32 %v364, %v402
    %v411 = vmul.f32 %v366, %v403
    %v412 = vmul.f32 %v368, %v404
    %v413 = vmul.f32 %v370, %v405
    %v414 = vmul.f32 %v372, %v406
    %v415 = vmul.f32 %v374, %v407
    %v416 = vmul.f32 %v376, %v408
    %417 = vrot.lane.b32.xlu0 %v152, 64
    %v418 = vpop.permute.xlu0 %417
    %419 = vrot.lane.b32.xlu0 %v157, 64
    %v420 = vpop.permute.xlu0 %419
    %421 = vrot.lane.b32.xlu0 %v163, 64
    %v422 = vpop.permute.xlu0 %421
    %423 = vrot.lane.b32.xlu0 %v165, 64
    %v424 = vpop.permute.xlu0 %423
    %425 = vrot.lane.b32.xlu0 %v167, 64
    %v426 = vpop.permute.xlu0 %425
    %427 = vrot.lane.b32.xlu0 %v169, 64
    %v428 = vpop.permute.xlu0 %427
    %429 = vrot.lane.b32.xlu0 %v171, 64
    %v430 = vpop.permute.xlu0 %429
    %431 = vrot.lane.b32.xlu0 %v173, 64
    %v432 = vpop.permute.xlu0 %431
    %v442 = vsel %vm328, %v409, 0
    %v445 = vsel %vm328, %v410, 0
    %v448 = vsel %vm328, %v411, 0
    %v451 = vsel %vm328, %v412, 0
    %v454 = vsel %vm328, %v413, 0
    %v457 = vsel %vm328, %v414, 0
    %v460 = vsel %vm328, %v415, 0
    %v463 = vsel %vm328, %v416, 0
    %465 = vmatprep.subr.mxu0 0.0
    %466 = vmatpush1.msra.mxu0 %v418
    %467 = vmatprep.subr.mxu0 0.0
    %468 = vmatpush1.msra.mxu0 %v420
    %469 = vmatprep.subr.mxu0 0.0
    %470 = vmatpush1.msra.mxu0 %v422
    %471 = vmatprep.subr.mxu0 0.0
    %472 = vmatpush1.msra.mxu0 %v424
    %473 = vmatprep.subr.mxu0 0.0
    %474 = vmatpush1.msra.mxu0 %v426
    %475 = vmatprep.subr.mxu0 0.0
    %476 = vmatpush1.msra.mxu0 %v428
    %477 = vmatprep.subr.mxu0 0.0
    %478 = vmatpush1.msra.mxu0 %v430
    %479 = vmatprep.subr.mxu0 0.0
    %480 = vmatpush1.msra.mxu0 %v432
    %481 = vmatprep.subr.mxu0 0.0
    %482 = vmatpush1.msra.mxu0 0.0
    %483 = vmatprep.subr.mxu0 0.0
    %484 = vmatpush1.msra.mxu0 0.0
    %485 = vmatprep.subr.mxu0 0.0
    %486 = vmatpush1.msra.mxu0 0.0
    %487 = vmatprep.subr.mxu0 0.0
    %488 = vmatpush1.msra.mxu0 0.0
    %489 = vmatprep.subr.mxu0 0.0
    %490 = vmatpush1.msra.mxu0 0.0
    %491 = vmatprep.subr.mxu0 0.0
    %492 = vmatpush1.msra.mxu0 0.0
    %493 = vmatprep.subr.mxu0 0.0
    %494 = vmatpush1.msra.mxu0 0.0
    %495 = vmatprep.subr.mxu0 0.0
    %496 = vmatpush1.msra.mxu0 0.0
    %497 = vmatprep.subr.mxu0 0.0
    %498 = vmatpush1.msra.mxu0 0.0
    %499 = vmatprep.subr.mxu0 0.0
    %500 = vmatpush1.msra.mxu0 0.0
    %501 = vmatprep.subr.mxu0 0.0
    %502 = vmatpush1.msra.mxu0 0.0
    %503 = vmatprep.subr.mxu0 0.0
    %504 = vmatpush1.msra.mxu0 0.0
    %505 = vmatprep.subr.mxu0 0.0
    %506 = vmatpush1.msra.mxu0 0.0
    %507 = vmatprep.subr.mxu0 0.0
    %508 = vmatpush1.msra.mxu0 0.0
    %509 = vmatprep.subr.mxu0 0.0
    %510 = vmatpush1.msra.mxu0 0.0
    %511 = vmatprep.subr.mxu0 0.0
    %512 = vmatpush1.msra.mxu0 0.0
    %513 = vmatprep.subr.mxu0 0.0
    %514 = vmatpush1.msra.mxu0 0.0
    %515 = vmatprep.subr.mxu0 0.0
    %516 = vmatpush1.msra.mxu0 0.0
    %517 = vmatprep.subr.mxu0 0.0
    %518 = vmatpush1.msra.mxu0 0.0
    %519 = vmatprep.subr.mxu0 0.0
    %520 = vmatpush1.msra.mxu0 0.0
    %521 = vmatprep.subr.mxu0 0.0
    %522 = vmatpush1.msra.mxu0 0.0
    %523 = vmatprep.subr.mxu0 0.0
    %524 = vmatpush1.msra.mxu0 0.0
    %525 = vmatprep.subr.mxu0 0.0
    %526 = vmatpush1.msra.mxu0 0.0
    %527 = vmatprep.subr.mxu0 0.0
    %528 = vmatpush1.msra.mxu0 0.0
    %529 = vmatprep.mubr.f32.mxu0 0.0
    %530 = vmatmul.mubr.f32.gmra.mrb[0].mxu0 %v442
    %v531 = vpop.f32.mrb[0].mxu0
    %v532 = vadd.f32 0.0, %v531
    %v533 = vpop.f32.mrb[0].mxu0
    %534 = vmatprep.mubr.f32.mxu0 0.0
    %535 = vmatmul.mubr.f32.gmra.mrb[0].mxu0 %v445
    %v536 = vpop.f32.mrb[0].mxu0
    %v537 = vadd.f32 0.0, %v536
    %v538 = vpop.f32.mrb[0].mxu0
    %539 = vmatprep.mubr.f32.mxu0 0.0
    %540 = vmatmul.mubr.f32.gmra.mrb[0].mxu0 %v448
    %v541 = vpop.f32.mrb[0].mxu0
    %v542 = vadd.f32 0.0, %v541
    %v543 = vpop.f32.mrb[0].mxu0
    %544 = vmatprep.mubr.f32.mxu0 0.0
    %545 = vmatmul.mubr.f32.gmra.mrb[0].mxu0 %v451
    %v546 = vpop.f32.mrb[0].mxu0
    %v547 = vadd.f32 0.0, %v546
    %v548 = vpop.f32.mrb[0].mxu0
    %549 = vmatprep.mubr.f32.mxu0 0.0
    %550 = vmatmul.mubr.f32.gmra.mrb[0].mxu0 %v454
    %v551 = vpop.f32.mrb[0].mxu0
    %v552 = vadd.f32 0.0, %v551
    %v553 = vpop.f32.mrb[0].mxu0
    %554 = vmatprep.mubr.f32.mxu0 0.0
    %555 = vmatmul.mubr.f32.gmra.mrb[0].mxu0 %v457
    %v556 = vpop.f32.mrb[0].mxu0
    %v557 = vadd.f32 0.0, %v556
    %v558 = vpop.f32.mrb[0].mxu0
    %559 = vmatprep.mubr.f32.mxu0 0.0
    %560 = vmatmul.mubr.f32.gmra.mrb[0].mxu0 %v460
    %v561 = vpop.f32.mrb[0].mxu0
    %v562 = vadd.f32 0.0, %v561
    %v563 = vpop.f32.mrb[0].mxu0
    %564 = vmatprep.mubr.f32.mxu0 0.0
    %565 = vmatmul.mubr.f32.gmra.mrb[0].mxu0 %v463
    %v566 = vpop.f32.mrb[0].mxu0
    %v567 = vadd.f32 0.0, %v566
    %v568 = vpop.f32.mrb[0].mxu0
    %569 = vdwg.mxu0
    %572 = vrot.lane.b32.xlu0 %v542, 8
    %v573 = vpop.permute.xlu0 %572
    %574 = vrot.lane.b32.xlu0 %v547, 8
    %v575 = vpop.permute.xlu0 %574
    %580 = vrot.lane.b32.xlu0 %v552, 16
    %v581 = vpop.permute.xlu0 %580
    %582 = vrot.lane.b32.xlu0 %v557, 16
    %v583 = vpop.permute.xlu0 %582
    %588 = vrot.lane.b32.xlu0 %v562, 24
    %v589 = vpop.permute.xlu0 %588
    %590 = vrot.lane.b32.xlu0 %v567, 24
    %v591 = vpop.permute.xlu0 %590
    %v594 = vsel %vm190, %v532, %v573
    %v595 = vsel %vm190, %v537, %v575
    %vm596 = vcmask 130048
    %v597 = vsel %vm596, %v594, %v581
    %v598 = vsel %vm596, %v595, %v583
    %vm599 = vcmask 195584
    %v600 = vsel %vm599, %v597, %v589
    %v601 = vsel %vm599, %v598, %v591
    %v602 = vld [vmem:[%s2 + $0x80] sm:$0xff]
    %v603 = vld [vmem:[%s2 + $0x88] sm:$0xff]
    %v604 = vld [vmem:[%s2 + $0x90] sm:$0xff]
    %v605 = vld [vmem:[%s2 + $0x98] sm:$0xff]
    %v606 = vld [vmem:[%s2 + $0xa3] sm:$0x1]
    %v607 = vlaneseq
    %v608 = vshrl.u32 %v607, 7
    %v609 = vsub.s32 0, %v608
    %v610 = vrot.slane %v606, %v609
    %v612 = vsel %vm22, %v600, 0
    %v615 = vsel %vm22, %v601, 0
    %617 = vmatprep.subr.mxu0 0.0
    %618 = vmatpush1.msra.mxu0 %v602
    %619 = vmatprep.subr.mxu0 0.0
    %620 = vmatpush1.msra.mxu0 %v603
    %621 = vmatprep.subr.mxu0 0.0
    %622 = vmatpush1.msra.mxu0 %v604
    %623 = vmatprep.subr.mxu0 0.0
    %624 = vmatpush1.msra.mxu0 %v605
    %625 = vmatprep.subr.mxu0 0.0
    %626 = vmatpush1.msra.mxu0 0.0
    %627 = vmatprep.subr.mxu0 0.0
    %628 = vmatpush1.msra.mxu0 0.0
    %629 = vmatprep.subr.mxu0 0.0
    %630 = vmatpush1.msra.mxu0 0.0
    %631 = vmatprep.subr.mxu0 0.0
    %632 = vmatpush1.msra.mxu0 0.0
    %633 = vmatprep.subr.mxu0 0.0
    %634 = vmatpush1.msra.mxu0 0.0
    %635 = vmatprep.subr.mxu0 0.0
    %636 = vmatpush1.msra.mxu0 0.0
    %637 = vmatprep.subr.mxu0 0.0
    %638 = vmatpush1.msra.mxu0 0.0
    %639 = vmatprep.subr.mxu0 0.0
    %640 = vmatpush1.msra.mxu0 0.0
    %641 = vmatprep.subr.mxu0 0.0
    %642 = vmatpush1.msra.mxu0 0.0
    %643 = vmatprep.subr.mxu0 0.0
    %644 = vmatpush1.msra.mxu0 0.0
    %645 = vmatprep.subr.mxu0 0.0
    %646 = vmatpush1.msra.mxu0 0.0
    %647 = vmatprep.subr.mxu0 0.0
    %648 = vmatpush1.msra.mxu0 0.0
    %649 = vmatprep.subr.mxu0 0.0
    %650 = vmatpush1.msra.mxu0 0.0
    %651 = vmatprep.subr.mxu0 0.0
    %652 = vmatpush1.msra.mxu0 0.0
    %653 = vmatprep.subr.mxu0 0.0
    %654 = vmatpush1.msra.mxu0 0.0
    %655 = vmatprep.subr.mxu0 0.0
    %656 = vmatpush1.msra.mxu0 0.0
    %657 = vmatprep.subr.mxu0 0.0
    %658 = vmatpush1.msra.mxu0 0.0
    %659 = vmatprep.subr.mxu0 0.0
    %660 = vmatpush1.msra.mxu0 0.0
    %661 = vmatprep.subr.mxu0 0.0
    %662 = vmatpush1.msra.mxu0 0.0
    %663 = vmatprep.subr.mxu0 0.0
    %664 = vmatpush1.msra.mxu0 0.0
    %665 = vmatprep.subr.mxu0 0.0
    %666 = vmatpush1.msra.mxu0 0.0
    %667 = vmatprep.subr.mxu0 0.0
    %668 = vmatpush1.msra.mxu0 0.0
    %669 = vmatprep.subr.mxu0 0.0
    %670 = vmatpush1.msra.mxu0 0.0
    %671 = vmatprep.subr.mxu0 0.0
    %672 = vmatpush1.msra.mxu0 0.0
    %673 = vmatprep.subr.mxu0 0.0
    %674 = vmatpush1.msra.mxu0 0.0
    %675 = vmatprep.subr.mxu0 0.0
    %676 = vmatpush1.msra.mxu0 0.0
    %677 = vmatprep.subr.mxu0 0.0
    %678 = vmatpush1.msra.mxu0 0.0
    %679 = vmatprep.subr.mxu0 0.0
    %680 = vmatpush1.msra.mxu0 0.0
    %681 = vmatprep.mubr.f32.mxu0 0.0
    %682 = vmatmul.mubr.f32.gmra.mrb[0].mxu0 %v612
    %v683 = vpop.f32.mrb[0].mxu0
    %v684 = vadd.f32 %v610, %v683
    %v685 = vpop.f32.mrb[0].mxu0
    %686 = vmatprep.mubr.f32.mxu0 0.0
    %687 = vmatmul.mubr.f32.gmra.mrb[0].mxu0 %v615
    %v688 = vpop.f32.mrb[0].mxu0
    %v689 = vadd.f32 %v610, %v688
    %v690 = vpop.f32.mrb[0].mxu0
    %691 = vdwg.mxu0
    %v692 = vadd.f32 %v684, %v60
    %v693 = vadd.f32 %v689, %v61
    %v694 = vld [vmem:[%s2 + $0xa4] sm:$0x1]
    %v695 = vld [vmem:[%s2 + $0xa5] sm:$0x1]
    %v696 = vsel %vm22, %v692, 0.0
    %697 = vadd.xlane.f32.xlu0 %v696
    %v698 = vpop.xlane.xlu0 %697
    %v699 = vsel %vm22, %v693, 0.0
    %700 = vadd.xlane.f32.xlu0 %v699
    %v701 = vpop.xlane.xlu0 %700
    %v702 = vmul.f32 %v698, %v29
    %v703 = vmul.f32 %v701, %v29
    %v704 = vsub.f32 %v692, %v702
    %v705 = vsub.f32 %v693, %v703
    %v706 = vmul.f32 %v704, %v704
    %v707 = vmul.f32 %v705, %v705
    %v708 = vsel %vm22, %v706, 0.0
    %709 = vadd.xlane.f32.xlu0 %v708
    %v710 = vpop.xlane.xlu0 %709
    %v711 = vsel %vm22, %v707, 0.0
    %712 = vadd.xlane.f32.xlu0 %v711
    %v713 = vpop.xlane.xlu0 %712
    %v714 = vmul.f32 %v710, %v29
    %v715 = vmul.f32 %v713, %v29
    %v716 = vadd.f32 %v714, 1e-12
    %v717 = vadd.f32 %v715, 1e-12
    %v718 = vrsqrt.pop %v716
    %v719 = vrsqrt.pop %v717
    %v720 = vmul.f32 %v704, %v718
    %v721 = vmul.f32 %v705, %v719
    %v722 = vlaneseq
    %v723 = vshrl.u32 %v722, 7
    %v724 = vsub.s32 0, %v723
    %v725 = vrot.slane %v694, %v724
    %v726 = vmul.f32 %v720, %v725
    %v727 = vmul.f32 %v721, %v725
    %v728 = vlaneseq
    %v729 = vshrl.u32 %v728, 7
    %v730 = vsub.s32 0, %v729
    %v731 = vrot.slane %v695, %v730
    %v732 = vadd.f32 %v726, %v731
    %v733 = vadd.f32 %v727, %v731
    %v734 = vld [vmem:[%s2 + $0x20] sm:$0xff]
    %v735 = vld [vmem:[%s2 + $0x28] sm:$0xff]
    %v736 = vld [vmem:[%s2 + $0x30] sm:$0xff]
    %v737 = vld [vmem:[%s2 + $0x38] sm:$0xff]
    %v738 = vld [vmem:[%s2 + $0xa1] sm:$0x1]
    %v739 = vlaneseq
    %v740 = vshrl.u32 %v739, 7
    %v741 = vsub.s32 0, %v740
    %v742 = vrot.slane %v738, %v741
    %v744 = vsel %vm22, %v732, 0
    %v747 = vsel %vm22, %v733, 0
    %749 = vmatprep.subr.mxu0 0.0
    %750 = vmatpush1.msra.mxu0 %v734
    %751 = vmatprep.subr.mxu0 0.0
    %752 = vmatpush1.msra.mxu0 %v735
    %753 = vmatprep.subr.mxu0 0.0
    %754 = vmatpush1.msra.mxu0 %v736
    %755 = vmatprep.subr.mxu0 0.0
    %756 = vmatpush1.msra.mxu0 %v737
    %757 = vmatprep.subr.mxu0 0.0
    %758 = vmatpush1.msra.mxu0 0.0
    %759 = vmatprep.subr.mxu0 0.0
    %760 = vmatpush1.msra.mxu0 0.0
    %761 = vmatprep.subr.mxu0 0.0
    %762 = vmatpush1.msra.mxu0 0.0
    %763 = vmatprep.subr.mxu0 0.0
    %764 = vmatpush1.msra.mxu0 0.0
    %765 = vmatprep.subr.mxu0 0.0
    %766 = vmatpush1.msra.mxu0 0.0
    %767 = vmatprep.subr.mxu0 0.0
    %768 = vmatpush1.msra.mxu0 0.0
    %769 = vmatprep.subr.mxu0 0.0
    %770 = vmatpush1.msra.mxu0 0.0
    %771 = vmatprep.subr.mxu0 0.0
    %772 = vmatpush1.msra.mxu0 0.0
    %773 = vmatprep.subr.mxu0 0.0
    %774 = vmatpush1.msra.mxu0 0.0
    %775 = vmatprep.subr.mxu0 0.0
    %776 = vmatpush1.msra.mxu0 0.0
    %777 = vmatprep.subr.mxu0 0.0
    %778 = vmatpush1.msra.mxu0 0.0
    %779 = vmatprep.subr.mxu0 0.0
    %780 = vmatpush1.msra.mxu0 0.0
    %781 = vmatprep.subr.mxu0 0.0
    %782 = vmatpush1.msra.mxu0 0.0
    %783 = vmatprep.subr.mxu0 0.0
    %784 = vmatpush1.msra.mxu0 0.0
    %785 = vmatprep.subr.mxu0 0.0
    %786 = vmatpush1.msra.mxu0 0.0
    %787 = vmatprep.subr.mxu0 0.0
    %788 = vmatpush1.msra.mxu0 0.0
    %789 = vmatprep.subr.mxu0 0.0
    %790 = vmatpush1.msra.mxu0 0.0
    %791 = vmatprep.subr.mxu0 0.0
    %792 = vmatpush1.msra.mxu0 0.0
    %793 = vmatprep.subr.mxu0 0.0
    %794 = vmatpush1.msra.mxu0 0.0
    %795 = vmatprep.subr.mxu0 0.0
    %796 = vmatpush1.msra.mxu0 0.0
    %797 = vmatprep.subr.mxu0 0.0
    %798 = vmatpush1.msra.mxu0 0.0
    %799 = vmatprep.subr.mxu0 0.0
    %800 = vmatpush1.msra.mxu0 0.0
    %801 = vmatprep.subr.mxu0 0.0
    %802 = vmatpush1.msra.mxu0 0.0
    %803 = vmatprep.subr.mxu0 0.0
    %804 = vmatpush1.msra.mxu0 0.0
    %805 = vmatprep.subr.mxu0 0.0
    %806 = vmatpush1.msra.mxu0 0.0
    %807 = vmatprep.subr.mxu0 0.0
    %808 = vmatpush1.msra.mxu0 0.0
    %809 = vmatprep.subr.mxu0 0.0
    %810 = vmatpush1.msra.mxu0 0.0
    %811 = vmatprep.subr.mxu0 0.0
    %812 = vmatpush1.msra.mxu0 0.0
    %813 = vmatprep.mubr.f32.mxu0 0.0
    %814 = vmatmul.mubr.f32.gmra.mrb[0].mxu0 %v744
    %v815 = vpop.f32.mrb[0].mxu0
    %v816 = vadd.f32 %v742, %v815
    %v817 = vpop.f32.mrb[0].mxu0
    %818 = vmatprep.mubr.f32.mxu0 0.0
    %819 = vmatmul.mubr.f32.gmra.mrb[0].mxu0 %v747
    %v820 = vpop.f32.mrb[0].mxu0
    %v821 = vadd.f32 %v742, %v820
    %v822 = vpop.f32.mrb[0].mxu0
    %823 = vdwg.mxu0
    %v824 = vmul.f32 %v816, 0.5
    %v825 = vmul.f32 %v821, 0.5
    %v826 = vmul.f32 %v816, 0.044715
    %v827 = vmul.f32 %v821, 0.044715
    %v828 = vmul.f32 %v826, %v816
    %v829 = vmul.f32 %v827, %v821
    %v830 = vmul.f32 %v828, %v816
    %v831 = vmul.f32 %v829, %v821
    %v832 = vadd.f32 %v816, %v830
    %v833 = vadd.f32 %v821, %v831
    %v834 = vmul.f32 %v832, 0.7978846
    %v835 = vmul.f32 %v833, 0.7978846
    %v836 = vtanh.pop %v834
    %v837 = vtanh.pop %v835
    %v838 = vadd.f32 %v836, 1.0
    %v839 = vadd.f32 %v837, 1.0
    %v840 = vmul.f32 %v824, %v838
    %v841 = vmul.f32 %v825, %v839
    %v842 = vld [vmem:[%s2 + $0x40] sm:$0xff]
    %v843 = vld [vmem:[%s2 + $0x48] sm:$0xff]
    %v844 = vld [vmem:[%s2 + $0x50] sm:$0xff]
    %v845 = vld [vmem:[%s2 + $0x58] sm:$0xff]
    %v846 = vld [vmem:[%s2 + $0x60] sm:$0xff]
    %v847 = vld [vmem:[%s2 + $0x68] sm:$0xff]
    %v848 = vld [vmem:[%s2 + $0x70] sm:$0xff]
    %v849 = vld [vmem:[%s2 + $0x78] sm:$0xff]
    %v850 = vld [vmem:[%s2 + $0xa2] sm:$0x1]
    %v851 = vlaneseq
    %v852 = vshrl.u32 %v851, 7
    %v853 = vsub.s32 0, %v852
    %v854 = vrot.slane %v850, %v853
    %v856 = vsel %vm328, %v840, 0
    %v859 = vsel %vm328, %v841, 0
    %861 = vmatprep.subr.mxu0 0.0
    %862 = vmatpush1.msra.mxu0 %v842
    %863 = vmatprep.subr.mxu0 0.0
    %864 = vmatpush1.msra.mxu0 %v843
    %865 = vmatprep.subr.mxu0 0.0
    %866 = vmatpush1.msra.mxu0 %v844
    %867 = vmatprep.subr.mxu0 0.0
    %868 = vmatpush1.msra.mxu0 %v845
    %869 = vmatprep.subr.mxu0 0.0
    %870 = vmatpush1.msra.mxu0 %v846
    %871 = vmatprep.subr.mxu0 0.0
    %872 = vmatpush1.msra.mxu0 %v847
    %873 = vmatprep.subr.mxu0 0.0
    %874 = vmatpush1.msra.mxu0 %v848
    %875 = vmatprep.subr.mxu0 0.0
    %876 = vmatpush1.msra.mxu0 %v849
    %877 = vmatprep.subr.mxu0 0.0
    %878 = vmatpush1.msra.mxu0 0.0
    %879 = vmatprep.subr.mxu0 0.0
    %880 = vmatpush1.msra.mxu0 0.0
    %881 = vmatprep.subr.mxu0 0.0
    %882 = vmatpush1.msra.mxu0 0.0
    %883 = vmatprep.subr.mxu0 0.0
    %884 = vmatpush1.msra.mxu0 0.0
    %885 = vmatprep.subr.mxu0 0.0
    %886 = vmatpush1.msra.mxu0 0.0
    %887 = vmatprep.subr.mxu0 0.0
    %888 = vmatpush1.msra.mxu0 0.0
    %889 = vmatprep.subr.mxu0 0.0
    %890 = vmatpush1.msra.mxu0 0.0
    %891 = vmatprep.subr.mxu0 0.0
    %892 = vmatpush1.msra.mxu0 0.0
    %893 = vmatprep.subr.mxu0 0.0
    %894 = vmatpush1.msra.mxu0 0.0
    %895 = vmatprep.subr.mxu0 0.0
    %896 = vmatpush1.msra.mxu0 0.0
    %897 = vmatprep.subr.mxu0 0.0
    %898 = vmatpush1.msra.mxu0 0.0
    %899 = vmatprep.subr.mxu0 0.0
    %900 = vmatpush1.msra.mxu0 0.0
    %901 = vmatprep.subr.mxu0 0.0
    %902 = vmatpush1.msra.mxu0 0.0
    %903 = vmatprep.subr.mxu0 0.0
    %904 = vmatpush1.msra.mxu0 0.0
    %905 = vmatprep.subr.mxu0 0.0
    %906 = vmatpush1.msra.mxu0 0.0
    %907 = vmatprep.subr.mxu0 0.0
    %908 = vmatpush1.msra.mxu0 0.0
    %909 = vmatprep.subr.mxu0 0.0
    %910 = vmatpush1.msra.mxu0 0.0
    %911 = vmatprep.subr.mxu0 0.0
    %912 = vmatpush1.msra.mxu0 0.0
    %913 = vmatprep.subr.mxu0 0.0
    %914 = vmatpush1.msra.mxu0 0.0
    %915 = vmatprep.subr.mxu0 0.0
    %916 = vmatpush1.msra.mxu0 0.0
    %917 = vmatprep.subr.mxu0 0.0
    %918 = vmatpush1.msra.mxu0 0.0
    %919 = vmatprep.subr.mxu0 0.0
    %920 = vmatpush1.msra.mxu0 0.0
    %921 = vmatprep.subr.mxu0 0.0
    %922 = vmatpush1.msra.mxu0 0.0
    %923 = vmatprep.subr.mxu0 0.0
    %924 = vmatpush1.msra.mxu0 0.0
    %925 = vmatprep.mubr.f32.mxu0 0.0
    %926 = vmatmul.mubr.f32.gmra.mrb[0].mxu0 %v856
    %v927 = vpop.f32.mrb[0].mxu0
    %v928 = vadd.f32 %v854, %v927
    %v929 = vpop.f32.mrb[0].mxu0
    %930 = vmatprep.mubr.f32.mxu0 0.0
    %931 = vmatmul.mubr.f32.gmra.mrb[0].mxu0 %v859
    %v932 = vpop.f32.mrb[0].mxu0
    %v933 = vadd.f32 %v854, %v932
    %v934 = vpop.f32.mrb[0].mxu0
    %935 = vdwg.mxu0
    %v936 = vadd.f32 %v928, %v732
    %v937 = vadd.f32 %v933, %v733
    %v938 = vld [vmem:[%s2 + $0xa6] sm:$0x1]
    %v939 = vld [vmem:[%s2 + $0xa7] sm:$0x1]
    %v940 = vsel %vm22, %v936, 0.0
    %941 = vadd.xlane.f32.xlu0 %v940
    %v942 = vpop.xlane.xlu0 %941
    %v943 = vsel %vm22, %v937, 0.0
    %944 = vadd.xlane.f32.xlu0 %v943
    %v945 = vpop.xlane.xlu0 %944
    %v946 = vmul.f32 %v942, %v29
    %v947 = vmul.f32 %v945, %v29
    %v948 = vsub.f32 %v936, %v946
    %v949 = vsub.f32 %v937, %v947
    %v950 = vmul.f32 %v948, %v948
    %v951 = vmul.f32 %v949, %v949
    %v952 = vsel %vm22, %v950, 0.0
    %953 = vadd.xlane.f32.xlu0 %v952
    %v954 = vpop.xlane.xlu0 %953
    %v955 = vsel %vm22, %v951, 0.0
    %956 = vadd.xlane.f32.xlu0 %v955
    %v957 = vpop.xlane.xlu0 %956
    %v958 = vmul.f32 %v954, %v29
    %v959 = vmul.f32 %v957, %v29
    %v960 = vadd.f32 %v958, 1e-12
    %v961 = vadd.f32 %v959, 1e-12
    %v962 = vrsqrt.pop %v960
    %v963 = vrsqrt.pop %v961
    %v964 = vmul.f32 %v948, %v962
    %v965 = vmul.f32 %v949, %v963
    %v966 = vlaneseq
    %v967 = vshrl.u32 %v966, 7
    %v968 = vsub.s32 0, %v967
    %v969 = vrot.slane %v938, %v968
    %v970 = vmul.f32 %v964, %v969
    %v971 = vmul.f32 %v965, %v969
    %v972 = vlaneseq
    %v973 = vshrl.u32 %v972, 7
    %v974 = vsub.s32 0, %v973
    %v975 = vrot.slane %v939, %v974
    %v976 = vadd.f32 %v970, %v975
    %v977 = vadd.f32 %v971, %v975
    %v978 = vld [vmem:[%s2 + $0xa8] sm:$0xff]
    %v979 = vld [vmem:[%s2 + $0xb0] sm:$0xff]
    %v980 = vld [vmem:[%s2 + $0xb8] sm:$0xff]
    %v981 = vld [vmem:[%s2 + $0xc0] sm:$0xff]
    %v982 = vld [vmem:[%s2 + $0x148] sm:$0x1]
    %v983 = vlaneseq
    %v984 = vshrl.u32 %v983, 7
    %v985 = vsub.s32 0, %v984
    %v986 = vrot.slane %v982, %v985
    %v988 = vsel %vm22, %v976, 0
    %v991 = vsel %vm22, %v977, 0
    %993 = vmatprep.subr.mxu0 0.0
    %994 = vmatpush1.msra.mxu0 %v978
    %995 = vmatprep.subr.mxu0 0.0
    %996 = vmatpush1.msra.mxu0 %v979
    %997 = vmatprep.subr.mxu0 0.0
    %998 = vmatpush1.msra.mxu0 %v980
    %999 = vmatprep.subr.mxu0 0.0
    %1000 = vmatpush1.msra.mxu0 %v981
    %1001 = vmatprep.subr.mxu0 0.0
    %1002 = vmatpush1.msra.mxu0 0.0
    %1003 = vmatprep.subr.mxu0 0.0
    %1004 = vmatpush1.msra.mxu0 0.0
    %1005 = vmatprep.subr.mxu0 0.0
    %1006 = vmatpush1.msra.mxu0 0.0
    %1007 = vmatprep.subr.mxu0 0.0
    %1008 = vmatpush1.msra.mxu0 0.0
    %1009 = vmatprep.subr.mxu0 0.0
    %1010 = vmatpush1.msra.mxu0 0.0
    %1011 = vmatprep.subr.mxu0 0.0
    %1012 = vmatpush1.msra.mxu0 0.0
    %1013 = vmatprep.subr.mxu0 0.0
    %1014 = vmatpush1.msra.mxu0 0.0
    %1015 = vmatprep.subr.mxu0 0.0
    %1016 = vmatpush1.msra.mxu0 0.0
    %1017 = vmatprep.subr.mxu0 0.0
    %1018 = vmatpush1.msra.mxu0 0.0
    %1019 = vmatprep.subr.mxu0 0.0
    %1020 = vmatpush1.msra.mxu0 0.0
    %1021 = vmatprep.subr.mxu0 0.0
    %1022 = vmatpush1.msra.mxu0 0.0
    %1023 = vmatprep.subr.mxu0 0.0
    %1024 = vmatpush1.msra.mxu0 0.0
    %1025 = vmatprep.subr.mxu0 0.0
    %1026 = vmatpush1.msra.mxu0 0.0
    %1027 = vmatprep.subr.mxu0 0.0
    %1028 = vmatpush1.msra.mxu0 0.0
    %1029 = vmatprep.subr.mxu0 0.0
    %1030 = vmatpush1.msra.mxu0 0.0
    %1031 = vmatprep.subr.mxu0 0.0
    %1032 = vmatpush1.msra.mxu0 0.0
    %1033 = vmatprep.subr.mxu0 0.0
    %1034 = vmatpush1.msra.mxu0 0.0
    %1035 = vmatprep.subr.mxu0 0.0
    %1036 = vmatpush1.msra.mxu0 0.0
    %1037 = vmatprep.subr.mxu0 0.0
    %1038 = vmatpush1.msra.mxu0 0.0
    %1039 = vmatprep.subr.mxu0 0.0
    %1040 = vmatpush1.msra.mxu0 0.0
    %1041 = vmatprep.subr.mxu0 0.0
    %1042 = vmatpush1.msra.mxu0 0.0
    %1043 = vmatprep.subr.mxu0 0.0
    %1044 = vmatpush1.msra.mxu0 0.0
    %1045 = vmatprep.subr.mxu0 0.0
    %1046 = vmatpush1.msra.mxu0 0.0
    %1047 = vmatprep.subr.mxu0 0.0
    %1048 = vmatpush1.msra.mxu0 0.0
    %1049 = vmatprep.subr.mxu0 0.0
    %1050 = vmatpush1.msra.mxu0 0.0
    %1051 = vmatprep.subr.mxu0 0.0
    %1052 = vmatpush1.msra.mxu0 0.0
    %1053 = vmatprep.subr.mxu0 0.0
    %1054 = vmatpush1.msra.mxu0 0.0
    %1055 = vmatprep.subr.mxu0 0.0
    %1056 = vmatpush1.msra.mxu0 0.0
    %1057 = vmatprep.mubr.f32.mxu0 0.0
    %1058 = vmatmul.mubr.f32.gmra.mrb[0].mxu0 %v988
    %v1059 = vpop.f32.mrb[0].mxu0
    %v1060 = vadd.f32 %v986, %v1059
    %v1061 = vpop.f32.mrb[0].mxu0
    %1062 = vmatprep.mubr.f32.mxu0 0.0
    %1063 = vmatmul.mubr.f32.gmra.mrb[0].mxu0 %v991
    %v1064 = vpop.f32.mrb[0].mxu0
    %v1065 = vadd.f32 %v986, %v1064
    %v1066 = vpop.f32.mrb[0].mxu0
    %1067 = vdwg.mxu0
    %1070 = vrot.lane.b32.xlu0 %v1060, 120
    %v1071 = vpop.permute.xlu0 %1070
    %1072 = vrot.lane.b32.xlu0 %v1065, 120
    %v1073 = vpop.permute.xlu0 %1072
    %1074 = vrot.lane.b32.xlu0 %v1060, 112
    %v1075 = vpop.permute.xlu0 %1074
    %1076 = vrot.lane.b32.xlu0 %v1065, 112
    %v1077 = vpop.permute.xlu0 %1076
    %1078 = vrot.lane.b32.xlu0 %v1060, 104
    %v1079 = vpop.permute.xlu0 %1078
    %1080 = vrot.lane.b32.xlu0 %v1065, 104
    %v1081 = vpop.permute.xlu0 %1080
    %1082 = vrot.lane.b32.xlu0 %v1060, 96
    %v1083 = vpop.permute.xlu0 %1082
    %1084 = vrot.lane.b32.xlu0 %v1065, 96
    %v1085 = vpop.permute.xlu0 %1084
    %1086 = vrot.lane.b32.xlu0 %v1071, 96
    %v1087 = vpop.permute.xlu0 %1086
    %1088 = vrot.lane.b32.xlu0 %v1073, 96
    %v1089 = vpop.permute.xlu0 %1088
    %1090 = vrot.lane.b32.xlu0 %v1075, 96
    %v1091 = vpop.permute.xlu0 %1090
    %1092 = vrot.lane.b32.xlu0 %v1077, 96
    %v1093 = vpop.permute.xlu0 %1092
    %1094 = vrot.lane.b32.xlu0 %v1079, 96
    %v1095 = vpop.permute.xlu0 %1094
    %1096 = vrot.lane.b32.xlu0 %v1081, 96
    %v1097 = vpop.permute.xlu0 %1096
    %v1098 = vsel %vm190, %v1060, 0
    %v1100 = vsel %vm190, %v1065, 0
    %v1102 = vsel %vm190, %v1071, 0
    %v1104 = vsel %vm190, %v1073, 0
    %v1106 = vsel %vm190, %v1075, 0
    %v1108 = vsel %vm190, %v1077, 0
    %v1110 = vsel %vm190, %v1079, 0
    %v1112 = vsel %vm190, %v1081, 0
    %v1114 = vsel %vm190, %v1083, 0
    %v1116 = vsel %vm190, %v1085, 0
    %v1118 = vsel %vm190, %v1087, 0
    %v1120 = vsel %vm190, %v1089, 0
    %v1122 = vsel %vm190, %v1091, 0
    %v1124 = vsel %vm190, %v1093, 0
    %v1126 = vsel %vm190, %v1095, 0
    %v1128 = vsel %vm190, %v1097, 0
    %1130 = vmatprep.subr.mxu0 0.0
    %1131 = vmatpush1.xpose.msra.mxu0 %v1114
    %1132 = vmatprep.subr.mxu0 0.0
    %1133 = vmatpush1.xpose.msra.mxu0 %v1116
    %1134 = vmatprep.subr.mxu0 0.0
    %1135 = vmatpush1.xpose.msra.mxu0 %v1118
    %1136 = vmatprep.subr.mxu0 0.0
    %1137 = vmatpush1.xpose.msra.mxu0 %v1120
    %1138 = vmatprep.subr.mxu0 0.0
    %1139 = vmatpush1.xpose.msra.mxu0 %v1122
    %1140 = vmatprep.subr.mxu0 0.0
    %1141 = vmatpush1.xpose.msra.mxu0 %v1124
    %1142 = vmatprep.subr.mxu0 0.0
    %1143 = vmatpush1.xpose.msra.mxu0 %v1126
    %1144 = vmatprep.subr.mxu0 0.0
    %1145 = vmatpush1.xpose.msra.mxu0 %v1128
    %1146 = vmatprep.subr.mxu0 0.0
    %1147 = vmatpush1.xpose.msra.mxu0 0.0
    %1148 = vmatprep.subr.mxu0 0.0
    %1149 = vmatpush1.xpose.msra.mxu0 0.0
    %1150 = vmatprep.subr.mxu0 0.0
    %1151 = vmatpush1.xpose.msra.mxu0 0.0
    %1152 = vmatprep.subr.mxu0 0.0
    %1153 = vmatpush1.xpose.msra.mxu0 0.0
    %1154 = vmatprep.subr.mxu0 0.0
    %1155 = vmatpush1.xpose.msra.mxu0 0.0
    %1156 = vmatprep.subr.mxu0 0.0
    %1157 = vmatpush1.xpose.msra.mxu0 0.0
    %1158 = vmatprep.subr.mxu0 0.0
    %1159 = vmatpush1.xpose.msra.mxu0 0.0
    %1160 = vmatprep.subr.mxu0 0.0
    %1161 = vmatpush1.xpose.msra.mxu0 0.0
    %1162 = vmatprep.subr.mxu0 0.0
    %1163 = vmatpush1.xpose.msra.mxu0 0.0
    %1164 = vmatprep.subr.mxu0 0.0
    %1165 = vmatpush1.xpose.msra.mxu0 0.0
    %1166 = vmatprep.subr.mxu0 0.0
    %1167 = vmatpush1.xpose.msra.mxu0 0.0
    %1168 = vmatprep.subr.mxu0 0.0
    %1169 = vmatpush1.xpose.msra.mxu0 0.0
    %1170 = vmatprep.subr.mxu0 0.0
    %1171 = vmatpush1.xpose.msra.mxu0 0.0
    %1172 = vmatprep.subr.mxu0 0.0
    %1173 = vmatpush1.xpose.msra.mxu0 0.0
    %1174 = vmatprep.subr.mxu0 0.0
    %1175 = vmatpush1.xpose.msra.mxu0 0.0
    %1176 = vmatprep.subr.mxu0 0.0
    %1177 = vmatpush1.xpose.msra.mxu0 0.0
    %1178 = vmatprep.subr.mxu0 0.0
    %1179 = vmatpush1.xpose.msra.mxu0 0.0
    %1180 = vmatprep.subr.mxu0 0.0
    %1181 = vmatpush1.xpose.msra.mxu0 0.0
    %1182 = vmatprep.subr.mxu0 0.0
    %1183 = vmatpush1.xpose.msra.mxu0 0.0
    %1184 = vmatprep.subr.mxu0 0.0
    %1185 = vmatpush1.xpose.msra.mxu0 0.0
    %1186 = vmatprep.subr.mxu0 0.0
    %1187 = vmatpush1.xpose.msra.mxu0 0.0
    %1188 = vmatprep.subr.mxu0 0.0
    %1189 = vmatpush1.xpose.msra.mxu0 0.0
    %1190 = vmatprep.subr.mxu0 0.0
    %1191 = vmatpush1.xpose.msra.mxu0 0.0
    %1192 = vmatprep.subr.mxu0 0.0
    %1193 = vmatpush1.xpose.msra.mxu0 0.0
    %1194 = vmatprep.mubr.f32.mxu0 0.0
    %1195 = vmatmul.mubr.f32.gmra.mrb[0].mxu0 %v1098
    %v1196 = vpop.f32.mrb[0].mxu0
    %v1197 = vadd.f32 %v62, %v1196
    %v1198 = vpop.f32.mrb[0].mxu0
    %1199 = vmatprep.mubr.f32.mxu0 0.0
    %1200 = vmatmul.mubr.f32.gmra.mrb[0].mxu0 %v1100
    %v1201 = vpop.f32.mrb[0].mxu0
    %v1202 = vadd.f32 %v63, %v1201
    %v1203 = vpop.f32.mrb[0].mxu0
    %1204 = vmatprep.mubr.f32.mxu0 0.0
    %1205 = vmatmul.mubr.f32.gmra.mrb[0].mxu0 %v1102
    %v1206 = vpop.f32.mrb[0].mxu0
    %v1207 = vadd.f32 %v64, %v1206
    %v1208 = vpop.f32.mrb[0].mxu0
    %1209 = vmatprep.mubr.f32.mxu0 0.0
    %1210 = vmatmul.mubr.f32.gmra.mrb[0].mxu0 %v1104
    %v1211 = vpop.f32.mrb[0].mxu0
    %v1212 = vadd.f32 %v65, %v1211
    %v1213 = vpop.f32.mrb[0].mxu0
    %1214 = vmatprep.mubr.f32.mxu0 0.0
    %1215 = vmatmul.mubr.f32.gmra.mrb[0].mxu0 %v1106
    %v1216 = vpop.f32.mrb[0].mxu0
    %v1217 = vadd.f32 %v66, %v1216
    %v1218 = vpop.f32.mrb[0].mxu0
    %1219 = vmatprep.mubr.f32.mxu0 0.0
    %1220 = vmatmul.mubr.f32.gmra.mrb[0].mxu0 %v1108
    %v1221 = vpop.f32.mrb[0].mxu0
    %v1222 = vadd.f32 %v67, %v1221
    %v1223 = vpop.f32.mrb[0].mxu0
    %1224 = vmatprep.mubr.f32.mxu0 0.0
    %1225 = vmatmul.mubr.f32.gmra.mrb[0].mxu0 %v1110
    %v1226 = vpop.f32.mrb[0].mxu0
    %v1227 = vadd.f32 %v68, %v1226
    %v1228 = vpop.f32.mrb[0].mxu0
    %1229 = vmatprep.mubr.f32.mxu0 0.0
    %1230 = vmatmul.mubr.f32.gmra.mrb[0].mxu0 %v1112
    %v1231 = vpop.f32.mrb[0].mxu0
    %v1232 = vadd.f32 %v69, %v1231
    %v1233 = vpop.f32.mrb[0].mxu0
    %1234 = vdwg.mxu0
    %v1235 = vsel %vm328, %v1197, -inf
    %1236 = vmax.xlane.f32.xlu0 %v1235
    %v1237 = vpop.xlane.xlu0 %1236
    %v1238 = vsel %vm328, %v1202, -inf
    %1239 = vmax.xlane.f32.xlu0 %v1238
    %v1240 = vpop.xlane.xlu0 %1239
    %v1241 = vsel %vm328, %v1207, -inf
    %1242 = vmax.xlane.f32.xlu0 %v1241
    %v1243 = vpop.xlane.xlu0 %1242
    %v1244 = vsel %vm328, %v1212, -inf
    %1245 = vmax.xlane.f32.xlu0 %v1244
    %v1246 = vpop.xlane.xlu0 %1245
    %v1247 = vsel %vm328, %v1217, -inf
    %1248 = vmax.xlane.f32.xlu0 %v1247
    %v1249 = vpop.xlane.xlu0 %1248
    %v1250 = vsel %vm328, %v1222, -inf
    %1251 = vmax.xlane.f32.xlu0 %v1250
    %v1252 = vpop.xlane.xlu0 %1251
    %v1253 = vsel %vm328, %v1227, -inf
    %1254 = vmax.xlane.f32.xlu0 %v1253
    %v1255 = vpop.xlane.xlu0 %1254
    %v1256 = vsel %vm328, %v1232, -inf
    %1257 = vmax.xlane.f32.xlu0 %v1256
    %v1258 = vpop.xlane.xlu0 %1257
    %v1259 = vsub.f32 %v1197, %v1237
    %v1260 = vsub.f32 %v1202, %v1240
    %v1261 = vsub.f32 %v1207, %v1243
    %v1262 = vsub.f32 %v1212, %v1246
    %v1263 = vsub.f32 %v1217, %v1249
    %v1264 = vsub.f32 %v1222, %v1252
    %v1265 = vsub.f32 %v1227, %v1255
    %v1266 = vsub.f32 %v1232, %v1258
    %v1267 = vmul.f32 %v1259, 1.442695
    %v1268 = vpow.pop %v1267
    %v1269 = vmul.f32 %v1260, 1.442695
    %v1270 = vpow.pop %v1269
    %v1271 = vmul.f32 %v1261, 1.442695
    %v1272 = vpow.pop %v1271
    %v1273 = vmul.f32 %v1262, 1.442695
    %v1274 = vpow.pop %v1273
    %v1275 = vmul.f32 %v1263, 1.442695
    %v1276 = vpow.pop %v1275
    %v1277 = vmul.f32 %v1264, 1.442695
    %v1278 = vpow.pop %v1277
    %v1279 = vmul.f32 %v1265, 1.442695
    %v1280 = vpow.pop %v1279
    %v1281 = vmul.f32 %v1266, 1.442695
    %v1282 = vpow.pop %v1281
    %v1283 = vsel %vm328, %v1268, 0.0
    %1284 = vadd.xlane.f32.xlu0 %v1283
    %v1285 = vpop.xlane.xlu0 %1284
    %v1286 = vsel %vm328, %v1270, 0.0
    %1287 = vadd.xlane.f32.xlu0 %v1286
    %v1288 = vpop.xlane.xlu0 %1287
    %v1289 = vsel %vm328, %v1272, 0.0
    %1290 = vadd.xlane.f32.xlu0 %v1289
    %v1291 = vpop.xlane.xlu0 %1290
    %v1292 = vsel %vm328, %v1274, 0.0
    %1293 = vadd.xlane.f32.xlu0 %v1292
    %v1294 = vpop.xlane.xlu0 %1293
    %v1295 = vsel %vm328, %v1276, 0.0
    %1296 = vadd.xlane.f32.xlu0 %v1295
    %v1297 = vpop.xlane.xlu0 %1296
    %v1298 = vsel %vm328, %v1278, 0.0
    %1299 = vadd.xlane.f32.xlu0 %v1298
    %v1300 = vpop.xlane.xlu0 %1299
    %v1301 = vsel %vm328, %v1280, 0.0
    %1302 = vadd.xlane.f32.xlu0 %v1301
    %v1303 = vpop.xlane.xlu0 %1302
    %v1304 = vsel %vm328, %v1282, 0.0
    %1305 = vadd.xlane.f32.xlu0 %v1304
    %v1306 = vpop.xlane.xlu0 %1305
    %v1307 = vrcp.pop %v1285
    %v1308 = vrcp.pop %v1288
    %v1309 = vrcp.pop %v1291
    %v1310 = vrcp.pop %v1294
    %v1311 = vrcp.pop %v1297
    %v1312 = vrcp.pop %v1300
    %v1313 = vrcp.pop %v1303
    %v1314 = vrcp.pop %v1306
    %v1315 = vmul.f32 %v1268, %v1307
    %v1316 = vmul.f32 %v1270, %v1308
    %v1317 = vmul.f32 %v1272, %v1309
    %v1318 = vmul.f32 %v1274, %v1310
    %v1319 = vmul.f32 %v1276, %v1311
    %v1320 = vmul.f32 %v1278, %v1312
    %v1321 = vmul.f32 %v1280, %v1313
    %v1322 = vmul.f32 %v1282, %v1314
    %1323 = vrot.lane.b32.xlu0 %v1060, 64
    %v1324 = vpop.permute.xlu0 %1323
    %1325 = vrot.lane.b32.xlu0 %v1065, 64
    %v1326 = vpop.permute.xlu0 %1325
    %1327 = vrot.lane.b32.xlu0 %v1071, 64
    %v1328 = vpop.permute.xlu0 %1327
    %1329 = vrot.lane.b32.xlu0 %v1073, 64
    %v1330 = vpop.permute.xlu0 %1329
    %1331 = vrot.lane.b32.xlu0 %v1075, 64
    %v1332 = vpop.permute.xlu0 %1331
    %1333 = vrot.lane.b32.xlu0 %v1077, 64
    %v1334 = vpop.permute.xlu0 %1333
    %1335 = vrot.lane.b32.xlu0 %v1079, 64
    %v1336 = vpop.permute.xlu0 %1335
    %1337 = vrot.lane.b32.xlu0 %v1081, 64
    %v1338 = vpop.permute.xlu0 %1337
    %v1348 = vsel %vm328, %v1315, 0
    %v1351 = vsel %vm328, %v1316, 0
    %v1354 = vsel %vm328, %v1317, 0
    %v1357 = vsel %vm328, %v1318, 0
    %v1360 = vsel %vm328, %v1319, 0
    %v1363 = vsel %vm328, %v1320, 0
    %v1366 = vsel %vm328, %v1321, 0
    %v1369 = vsel %vm328, %v1322, 0
    %1371 = vmatprep.subr.mxu0 0.0
    %1372 = vmatpush1.msra.mxu0 %v1324
    %1373 = vmatprep.subr.mxu0 0.0
    %1374 = vmatpush1.msra.mxu0 %v1326
    %1375 = vmatprep.subr.mxu0 0.0
    %1376 = vmatpush1.msra.mxu0 %v1328
    %1377 = vmatprep.subr.mxu0 0.0
    %1378 = vmatpush1.msra.mxu0 %v1330
    %1379 = vmatprep.subr.mxu0 0.0
    %1380 = vmatpush1.msra.mxu0 %v1332
    %1381 = vmatprep.subr.mxu0 0.0
    %1382 = vmatpush1.msra.mxu0 %v1334
    %1383 = vmatprep.subr.mxu0 0.0
    %1384 = vmatpush1.msra.mxu0 %v1336
    %1385 = vmatprep.subr.mxu0 0.0
    %1386 = vmatpush1.msra.mxu0 %v1338
    %1387 = vmatprep.subr.mxu0 0.0
    %1388 = vmatpush1.msra.mxu0 0.0
    %1389 = vmatprep.subr.mxu0 0.0
    %1390 = vmatpush1.msra.mxu0 0.0
    %1391 = vmatprep.subr.mxu0 0.0
    %1392 = vmatpush1.msra.mxu0 0.0
    %1393 = vmatprep.subr.mxu0 0.0
    %1394 = vmatpush1.msra.mxu0 0.0
    %1395 = vmatprep.subr.mxu0 0.0
    %1396 = vmatpush1.msra.mxu0 0.0
    %1397 = vmatprep.subr.mxu0 0.0
    %1398 = vmatpush1.msra.mxu0 0.0
    %1399 = vmatprep.subr.mxu0 0.0
    %1400 = vmatpush1.msra.mxu0 0.0
    %1401 = vmatprep.subr.mxu0 0.0
    %1402 = vmatpush1.msra.mxu0 0.0
    %1403 = vmatprep.subr.mxu0 0.0
    %1404 = vmatpush1.msra.mxu0 0.0
    %1405 = vmatprep.subr.mxu0 0.0
    %1406 = vmatpush1.msra.mxu0 0.0
    %1407 = vmatprep.subr.mxu0 0.0
    %1408 = vmatpush1.msra.mxu0 0.0
    %1409 = vmatprep.subr.mxu0 0.0
    %1410 = vmatpush1.msra.mxu0 0.0
    %1411 = vmatprep.subr.mxu0 0.0
    %1412 = vmatpush1.msra.mxu0 0.0
    %1413 = vmatprep.subr.mxu0 0.0
    %1414 = vmatpush1.msra.mxu0 0.0
    %1415 = vmatprep.subr.mxu0 0.0
    %1416 = vmatpush1.msra.mxu0 0.0
    %1417 = vmatprep.subr.mxu0 0.0
    %1418 = vmatpush1.msra.mxu0 0.0
    %1419 = vmatprep.subr.mxu0 0.0
    %1420 = vmatpush1.msra.mxu0 0.0
    %1421 = vmatprep.subr.mxu0 0.0
    %1422 = vmatpush1.msra.mxu0 0.0
    %1423 = vmatprep.subr.mxu0 0.0
    %1424 = vmatpush1.msra.mxu0 0.0
    %1425 = vmatprep.subr.mxu0 0.0
    %1426 = vmatpush1.msra.mxu0 0.0
    %1427 = vmatprep.subr.mxu0 0.0
    %1428 = vmatpush1.msra.mxu0 0.0
    %1429 = vmatprep.subr.mxu0 0.0
    %1430 = vmatpush1.msra.mxu0 0.0
    %1431 = vmatprep.subr.mxu0 0.0
    %1432 = vmatpush1.msra.mxu0 0.0
    %1433 = vmatprep.subr.mxu0 0.0
    %1434 = vmatpush1.msra.mxu0 0.0
    %1435 = vmatprep.mubr.f32.mxu0 0.0
    %1436 = vmatmul.mubr.f32.gmra.mrb[0].mxu0 %v1348
    %v1437 = vpop.f32.mrb[0].mxu0
    %v1438 = vadd.f32 0.0, %v1437
    %v1439 = vpop.f32.mrb[0].mxu0
    %1440 = vmatprep.mubr.f32.mxu0 0.0
    %1441 = vmatmul.mubr.f32.gmra.mrb[0].mxu0 %v1351
    %v1442 = vpop.f32.mrb[0].mxu0
    %v1443 = vadd.f32 0.0, %v1442
    %v1444 = vpop.f32.mrb[0].mxu0
    %1445 = vmatprep.mubr.f32.mxu0 0.0
    %1446 = vmatmul.mubr.f32.gmra.mrb[0].mxu0 %v1354
    %v1447 = vpop.f32.mrb[0].mxu0
    %v1448 = vadd.f32 0.0, %v1447
    %v1449 = vpop.f32.mrb[0].mxu0
    %1450 = vmatprep.mubr.f32.mxu0 0.0
    %1451 = vmatmul.mubr.f32.gmra.mrb[0].mxu0 %v1357
    %v1452 = vpop.f32.mrb[0].mxu0
    %v1453 = vadd.f32 0.0, %v1452
    %v1454 = vpop.f32.mrb[0].mxu0
    %1455 = vmatprep.mubr.f32.mxu0 0.0
    %1456 = vmatmul.mubr.f32.gmra.mrb[0].mxu0 %v1360
    %v1457 = vpop.f32.mrb[0].mxu0
    %v1458 = vadd.f32 0.0, %v1457
    %v1459 = vpop.f32.mrb[0].mxu0
    %1460 = vmatprep.mubr.f32.mxu0 0.0
    %1461 = vmatmul.mubr.f32.gmra.mrb[0].mxu0 %v1363
    %v1462 = vpop.f32.mrb[0].mxu0
    %v1463 = vadd.f32 0.0, %v1462
    %v1464 = vpop.f32.mrb[0].mxu0
    %1465 = vmatprep.mubr.f32.mxu0 0.0
    %1466 = vmatmul.mubr.f32.gmra.mrb[0].mxu0 %v1366
    %v1467 = vpop.f32.mrb[0].mxu0
    %v1468 = vadd.f32 0.0, %v1467
    %v1469 = vpop.f32.mrb[0].mxu0
    %1470 = vmatprep.mubr.f32.mxu0 0.0
    %1471 = vmatmul.mubr.f32.gmra.mrb[0].mxu0 %v1369
    %v1472 = vpop.f32.mrb[0].mxu0
    %v1473 = vadd.f32 0.0, %v1472
    %v1474 = vpop.f32.mrb[0].mxu0
    %1475 = vdwg.mxu0
    %1478 = vrot.lane.b32.xlu0 %v1448, 8
    %v1479 = vpop.permute.xlu0 %1478
    %1480 = vrot.lane.b32.xlu0 %v1453, 8
    %v1481 = vpop.permute.xlu0 %1480
    %1486 = vrot.lane.b32.xlu0 %v1458, 16
    %v1487 = vpop.permute.xlu0 %1486
    %1488 = vrot.lane.b32.xlu0 %v1463, 16
    %v1489 = vpop.permute.xlu0 %1488
    %1494 = vrot.lane.b32.xlu0 %v1468, 24
    %v1495 = vpop.permute.xlu0 %1494
    %1496 = vrot.lane.b32.xlu0 %v1473, 24
    %v1497 = vpop.permute.xlu0 %1496
    %v1500 = vsel %vm190, %v1438, %v1479
    %v1501 = vsel %vm190, %v1443, %v1481
    %v1502 = vsel %vm596, %v1500, %v1487
    %v1503 = vsel %vm596, %v1501, %v1489
    %v1504 = vsel %vm599, %v1502, %v1495
    %v1505 = vsel %vm599, %v1503, %v1497
    %v1506 = vld [vmem:[%s2 + $0x128] sm:$0xff]
    %v1507 = vld [vmem:[%s2 + $0x130] sm:$0xff]
    %v1508 = vld [vmem:[%s2 + $0x138] sm:$0xff]
    %v1509 = vld [vmem:[%s2 + $0x140] sm:$0xff]
    %v1510 = vld [vmem:[%s2 + $0x14b] sm:$0x1]
    %v1511 = vlaneseq
    %v1512 = vshrl.u32 %v1511, 7
    %v1513 = vsub.s32 0, %v1512
    %v1514 = vrot.slane %v1510, %v1513
    %v1516 = vsel %vm22, %v1504, 0
    %v1519 = vsel %vm22, %v1505, 0
    %1521 = vmatprep.subr.mxu0 0.0
    %1522 = vmatpush1.msra.mxu0 %v1506
    %1523 = vmatprep.subr.mxu0 0.0
    %1524 = vmatpush1.msra.mxu0 %v1507
    %1525 = vmatprep.subr.mxu0 0.0
    %1526 = vmatpush1.msra.mxu0 %v1508
    %1527 = vmatprep.subr.mxu0 0.0
    %1528 = vmatpush1.msra.mxu0 %v1509
    %1529 = vmatprep.subr.mxu0 0.0
    %1530 = vmatpush1.msra.mxu0 0.0
    %1531 = vmatprep.subr.mxu0 0.0
    %1532 = vmatpush1.msra.mxu0 0.0
    %1533 = vmatprep.subr.mxu0 0.0
    %1534 = vmatpush1.msra.mxu0 0.0
    %1535 = vmatprep.subr.mxu0 0.0
    %1536 = vmatpush1.msra.mxu0 0.0
    %1537 = vmatprep.subr.mxu0 0.0
    %1538 = vmatpush1.msra.mxu0 0.0
    %1539 = vmatprep.subr.mxu0 0.0
    %1540 = vmatpush1.msra.mxu0 0.0
    %1541 = vmatprep.subr.mxu0 0.0
    %1542 = vmatpush1.msra.mxu0 0.0
    %1543 = vmatprep.subr.mxu0 0.0
    %1544 = vmatpush1.msra.mxu0 0.0
    %1545 = vmatprep.subr.mxu0 0.0
    %1546 = vmatpush1.msra.mxu0 0.0
    %1547 = vmatprep.subr.mxu0 0.0
    %1548 = vmatpush1.msra.mxu0 0.0
    %1549 = vmatprep.subr.mxu0 0.0
    %1550 = vmatpush1.msra.mxu0 0.0
    %1551 = vmatprep.subr.mxu0 0.0
    %1552 = vmatpush1.msra.mxu0 0.0
    %1553 = vmatprep.subr.mxu0 0.0
    %1554 = vmatpush1.msra.mxu0 0.0
    %1555 = vmatprep.subr.mxu0 0.0
    %1556 = vmatpush1.msra.mxu0 0.0
    %1557 = vmatprep.subr.mxu0 0.0
    %1558 = vmatpush1.msra.mxu0 0.0
    %1559 = vmatprep.subr.mxu0 0.0
    %1560 = vmatpush1.msra.mxu0 0.0
    %1561 = vmatprep.subr.mxu0 0.0
    %1562 = vmatpush1.msra.mxu0 0.0
    %1563 = vmatprep.subr.mxu0 0.0
    %1564 = vmatpush1.msra.mxu0 0.0
    %1565 = vmatprep.subr.mxu0 0.0
    %1566 = vmatpush1.msra.mxu0 0.0
    %1567 = vmatprep.subr.mxu0 0.0
    %1568 = vmatpush1.msra.mxu0 0.0
    %1569 = vmatprep.subr.mxu0 0.0
    %1570 = vmatpush1.msra.mxu0 0.0
    %1571 = vmatprep.subr.mxu0 0.0
    %1572 = vmatpush1.msra.mxu0 0.0
    %1573 = vmatprep.subr.mxu0 0.0
    %1574 = vmatpush1.msra.mxu0 0.0
    %1575 = vmatprep.subr.mxu0 0.0
    %1576 = vmatpush1.msra.mxu0 0.0
    %1577 = vmatprep.subr.mxu0 0.0
    %1578 = vmatpush1.msra.mxu0 0.0
    %1579 = vmatprep.subr.mxu0 0.0
    %1580 = vmatpush1.msra.mxu0 0.0
    %1581 = vmatprep.subr.mxu0 0.0
    %1582 = vmatpush1.msra.mxu0 0.0
    %1583 = vmatprep.subr.mxu0 0.0
    %1584 = vmatpush1.msra.mxu0 0.0
    %1585 = vmatprep.mubr.f32.mxu0 0.0
    %1586 = vmatmul.mubr.f32.gmra.mrb[0].mxu0 %v1516
    %v1587 = vpop.f32.mrb[0].mxu0
    %v1588 = vadd.f32 %v1514, %v1587
    %v1589 = vpop.f32.mrb[0].mxu0
    %1590 = vmatprep.mubr.f32.mxu0 0.0
    %1591 = vmatmul.mubr.f32.gmra.mrb[0].mxu0 %v1519
    %v1592 = vpop.f32.mrb[0].mxu0
    %v1593 = vadd.f32 %v1514, %v1592
    %v1594 = vpop.f32.mrb[0].mxu0
    %1595 = vdwg.mxu0
    %v1596 = vadd.f32 %v1588, %v976
    %v1597 = vadd.f32 %v1593, %v977
    %v1598 = vld [vmem:[%s2 + $0x14c] sm:$0x1]
    %v1599 = vld [vmem:[%s2 + $0x14d] sm:$0x1]
    %v1600 = vsel %vm22, %v1596, 0.0
    %1601 = vadd.xlane.f32.xlu0 %v1600
    %v1602 = vpop.xlane.xlu0 %1601
    %v1603 = vsel %vm22, %v1597, 0.0
    %1604 = vadd.xlane.f32.xlu0 %v1603
    %v1605 = vpop.xlane.xlu0 %1604
    %v1606 = vmul.f32 %v1602, %v29
    %v1607 = vmul.f32 %v1605, %v29
    %v1608 = vsub.f32 %v1596, %v1606
    %v1609 = vsub.f32 %v1597, %v1607
    %v1610 = vmul.f32 %v1608, %v1608
    %v1611 = vmul.f32 %v1609, %v1609
    %v1612 = vsel %vm22, %v1610, 0.0
    %1613 = vadd.xlane.f32.xlu0 %v1612
    %v1614 = vpop.xlane.xlu0 %1613
    %v1615 = vsel %vm22, %v1611, 0.0
    %1616 = vadd.xlane.f32.xlu0 %v1615
    %v1617 = vpop.xlane.xlu0 %1616
    %v1618 = vmul.f32 %v1614, %v29
    %v1619 = vmul.f32 %v1617, %v29
    %v1620 = vadd.f32 %v1618, 1e-12
    %v1621 = vadd.f32 %v1619, 1e-12
    %v1622 = vrsqrt.pop %v1620
    %v1623 = vrsqrt.pop %v1621
    %v1624 = vmul.f32 %v1608, %v1622
    %v1625 = vmul.f32 %v1609, %v1623
    %v1626 = vlaneseq
    %v1627 = vshrl.u32 %v1626, 7
    %v1628 = vsub.s32 0, %v1627
    %v1629 = vrot.slane %v1598, %v1628
    %v1630 = vmul.f32 %v1624, %v1629
    %v1631 = vmul.f32 %v1625, %v1629
    %v1632 = vlaneseq
    %v1633 = vshrl.u32 %v1632, 7
    %v1634 = vsub.s32 0, %v1633
    %v1635 = vrot.slane %v1599, %v1634
    %v1636 = vadd.f32 %v1630, %v1635
    %v1637 = vadd.f32 %v1631, %v1635
    %v1638 = vld [vmem:[%s2 + $0xc8] sm:$0xff]
    %v1639 = vld [vmem:[%s2 + $0xd0] sm:$0xff]
    %v1640 = vld [vmem:[%s2 + $0xd8] sm:$0xff]
    %v1641 = vld [vmem:[%s2 + $0xe0] sm:$0xff]
    %v1642 = vld [vmem:[%s2 + $0x149] sm:$0x1]
    %v1643 = vlaneseq
    %v1644 = vshrl.u32 %v1643, 7
    %v1645 = vsub.s32 0, %v1644
    %v1646 = vrot.slane %v1642, %v1645
    %v1648 = vsel %vm22, %v1636, 0
    %v1651 = vsel %vm22, %v1637, 0
    %1653 = vmatprep.subr.mxu0 0.0
    %1654 = vmatpush1.msra.mxu0 %v1638
    %1655 = vmatprep.subr.mxu0 0.0
    %1656 = vmatpush1.msra.mxu0 %v1639
    %1657 = vmatprep.subr.mxu0 0.0
    %1658 = vmatpush1.msra.mxu0 %v1640
    %1659 = vmatprep.subr.mxu0 0.0
    %1660 = vmatpush1.msra.mxu0 %v1641
    %1661 = vmatprep.subr.mxu0 0.0
    %1662 = vmatpush1.msra.mxu0 0.0
    %1663 = vmatprep.subr.mxu0 0.0
    %1664 = vmatpush1.msra.mxu0 0.0
    %1665 = vmatprep.subr.mxu0 0.0
    %1666 = vmatpush1.msra.mxu0 0.0
    %1667 = vmatprep.subr.mxu0 0.0
    %1668 = vmatpush1.msra.mxu0 0.0
    %1669 = vmatprep.subr.mxu0 0.0
    %1670 = vmatpush1.msra.mxu0 0.0
    %1671 = vmatprep.subr.mxu0 0.0
    %1672 = vmatpush1.msra.mxu0 0.0
    %1673 = vmatprep.subr.mxu0 0.0
    %1674 = vmatpush1.msra.mxu0 0.0
    %1675 = vmatprep.subr.mxu0 0.0
    %1676 = vmatpush1.msra.mxu0 0.0
    %1677 = vmatprep.subr.mxu0 0.0
    %1678 = vmatpush1.msra.mxu0 0.0
    %1679 = vmatprep.subr.mxu0 0.0
    %1680 = vmatpush1.msra.mxu0 0.0
    %1681 = vmatprep.subr.mxu0 0.0
    %1682 = vmatpush1.msra.mxu0 0.0
    %1683 = vmatprep.subr.mxu0 0.0
    %1684 = vmatpush1.msra.mxu0 0.0
    %1685 = vmatprep.subr.mxu0 0.0
    %1686 = vmatpush1.msra.mxu0 0.0
    %1687 = vmatprep.subr.mxu0 0.0
    %1688 = vmatpush1.msra.mxu0 0.0
    %1689 = vmatprep.subr.mxu0 0.0
    %1690 = vmatpush1.msra.mxu0 0.0
    %1691 = vmatprep.subr.mxu0 0.0
    %1692 = vmatpush1.msra.mxu0 0.0
    %1693 = vmatprep.subr.mxu0 0.0
    %1694 = vmatpush1.msra.mxu0 0.0
    %1695 = vmatprep.subr.mxu0 0.0
    %1696 = vmatpush1.msra.mxu0 0.0
    %1697 = vmatprep.subr.mxu0 0.0
    %1698 = vmatpush1.msra.mxu0 0.0
    %1699 = vmatprep.subr.mxu0 0.0
    %1700 = vmatpush1.msra.mxu0 0.0
    %1701 = vmatprep.subr.mxu0 0.0
    %1702 = vmatpush1.msra.mxu0 0.0
    %1703 = vmatprep.subr.mxu0 0.0
    %1704 = vmatpush1.msra.mxu0 0.0
    %1705 = vmatprep.subr.mxu0 0.0
    %1706 = vmatpush1.msra.mxu0 0.0
    %1707 = vmatprep.subr.mxu0 0.0
    %1708 = vmatpush1.msra.mxu0 0.0
    %1709 = vmatprep.subr.mxu0 0.0
    %1710 = vmatpush1.msra.mxu0 0.0
    %1711 = vmatprep.subr.mxu0 0.0
    %1712 = vmatpush1.msra.mxu0 0.0
    %1713 = vmatprep.subr.mxu0 0.0
    %1714 = vmatpush1.msra.mxu0 0.0
    %1715 = vmatprep.subr.mxu0 0.0
    %1716 = vmatpush1.msra.mxu0 0.0
    %1717 = vmatprep.mubr.f32.mxu0 0.0
    %1718 = vmatmul.mubr.f32.gmra.mrb[0].mxu0 %v1648
    %v1719 = vpop.f32.mrb[0].mxu0
    %v1720 = vadd.f32 %v1646, %v1719
    %v1721 = vpop.f32.mrb[0].mxu0
    %1722 = vmatprep.mubr.f32.mxu0 0.0
    %1723 = vmatmul.mubr.f32.gmra.mrb[0].mxu0 %v1651
    %v1724 = vpop.f32.mrb[0].mxu0
    %v1725 = vadd.f32 %v1646, %v1724
    %v1726 = vpop.f32.mrb[0].mxu0
    %1727 = vdwg.mxu0
    %v1728 = vmul.f32 %v1720, 0.5
    %v1729 = vmul.f32 %v1725, 0.5
    %v1730 = vmul.f32 %v1720, 0.044715
    %v1731 = vmul.f32 %v1725, 0.044715
    %v1732 = vmul.f32 %v1730, %v1720
    %v1733 = vmul.f32 %v1731, %v1725
    %v1734 = vmul.f32 %v1732, %v1720
    %v1735 = vmul.f32 %v1733, %v1725
    %v1736 = vadd.f32 %v1720, %v1734
    %v1737 = vadd.f32 %v1725, %v1735
    %v1738 = vmul.f32 %v1736, 0.7978846
    %v1739 = vmul.f32 %v1737, 0.7978846
    %v1740 = vtanh.pop %v1738
    %v1741 = vtanh.pop %v1739
    %v1742 = vadd.f32 %v1740, 1.0
    %v1743 = vadd.f32 %v1741, 1.0
    %v1744 = vmul.f32 %v1728, %v1742
    %v1745 = vmul.f32 %v1729, %v1743
    %v1746 = vld [vmem:[%s2 + $0xe8] sm:$0xff]
    %v1747 = vld [vmem:[%s2 + $0xf0] sm:$0xff]
    %v1748 = vld [vmem:[%s2 + $0xf8] sm:$0xff]
    %v1749 = vld [vmem:[%s2 + $0x100] sm:$0xff]
    %v1750 = vld [vmem:[%s2 + $0x108] sm:$0xff]
    %v1751 = vld [vmem:[%s2 + $0x110] sm:$0xff]
    %v1752 = vld [vmem:[%s2 + $0x118] sm:$0xff]
    %v1753 = vld [vmem:[%s2 + $0x120] sm:$0xff]
    %v1754 = vld [vmem:[%s2 + $0x14a] sm:$0x1]
    %v1755 = vlaneseq
    %v1756 = vshrl.u32 %v1755, 7
    %v1757 = vsub.s32 0, %v1756
    %v1758 = vrot.slane %v1754, %v1757
    %v1760 = vsel %vm328, %v1744, 0
    %v1763 = vsel %vm328, %v1745, 0
    %1765 = vmatprep.subr.mxu0 0.0
    %1766 = vmatpush1.msra.mxu0 %v1746
    %1767 = vmatprep.subr.mxu0 0.0
    %1768 = vmatpush1.msra.mxu0 %v1747
    %1769 = vmatprep.subr.mxu0 0.0
    %1770 = vmatpush1.msra.mxu0 %v1748
    %1771 = vmatprep.subr.mxu0 0.0
    %1772 = vmatpush1.msra.mxu0 %v1749
    %1773 = vmatprep.subr.mxu0 0.0
    %1774 = vmatpush1.msra.mxu0 %v1750
    %1775 = vmatprep.subr.mxu0 0.0
    %1776 = vmatpush1.msra.mxu0 %v1751
    %1777 = vmatprep.subr.mxu0 0.0
    %1778 = vmatpush1.msra.mxu0 %v1752
    %1779 = vmatprep.subr.mxu0 0.0
    %1780 = vmatpush1.msra.mxu0 %v1753
    %1781 = vmatprep.subr.mxu0 0.0
    %1782 = vmatpush1.msra.mxu0 0.0
    %1783 = vmatprep.subr.mxu0 0.0
    %1784 = vmatpush1.msra.mxu0 0.0
    %1785 = vmatprep.subr.mxu0 0.0
    %1786 = vmatpush1.msra.mxu0 0.0
    %1787 = vmatprep.subr.mxu0 0.0
    %1788 = vmatpush1.msra.mxu0 0.0
    %1789 = vmatprep.subr.mxu0 0.0
    %1790 = vmatpush1.msra.mxu0 0.0
    %1791 = vmatprep.subr.mxu0 0.0
    %1792 = vmatpush1.msra.mxu0 0.0
    %1793 = vmatprep.subr.mxu0 0.0
    %1794 = vmatpush1.msra.mxu0 0.0
    %1795 = vmatprep.subr.mxu0 0.0
    %1796 = vmatpush1.msra.mxu0 0.0
    %1797 = vmatprep.subr.mxu0 0.0
    %1798 = vmatpush1.msra.mxu0 0.0
    %1799 = vmatprep.subr.mxu0 0.0
    %1800 = vmatpush1.msra.mxu0 0.0
    %1801 = vmatprep.subr.mxu0 0.0
    %1802 = vmatpush1.msra.mxu0 0.0
    %1803 = vmatprep.subr.mxu0 0.0
    %1804 = vmatpush1.msra.mxu0 0.0
    %1805 = vmatprep.subr.mxu0 0.0
    %1806 = vmatpush1.msra.mxu0 0.0
    %1807 = vmatprep.subr.mxu0 0.0
    %1808 = vmatpush1.msra.mxu0 0.0
    %1809 = vmatprep.subr.mxu0 0.0
    %1810 = vmatpush1.msra.mxu0 0.0
    %1811 = vmatprep.subr.mxu0 0.0
    %1812 = vmatpush1.msra.mxu0 0.0
    %1813 = vmatprep.subr.mxu0 0.0
    %1814 = vmatpush1.msra.mxu0 0.0
    %1815 = vmatprep.subr.mxu0 0.0
    %1816 = vmatpush1.msra.mxu0 0.0
    %1817 = vmatprep.subr.mxu0 0.0
    %1818 = vmatpush1.msra.mxu0 0.0
    %1819 = vmatprep.subr.mxu0 0.0
    %1820 = vmatpush1.msra.mxu0 0.0
    %1821 = vmatprep.subr.mxu0 0.0
    %1822 = vmatpush1.msra.mxu0 0.0
    %1823 = vmatprep.subr.mxu0 0.0
    %1824 = vmatpush1.msra.mxu0 0.0
    %1825 = vmatprep.subr.mxu0 0.0
    %1826 = vmatpush1.msra.mxu0 0.0
    %1827 = vmatprep.subr.mxu0 0.0
    %1828 = vmatpush1.msra.mxu0 0.0
    %1829 = vmatprep.mubr.f32.mxu0 0.0
    %1830 = vmatmul.mubr.f32.gmra.mrb[0].mxu0 %v1760
    %v1831 = vpop.f32.mrb[0].mxu0
    %v1832 = vadd.f32 %v1758, %v1831
    %v1833 = vpop.f32.mrb[0].mxu0
    %1834 = vmatprep.mubr.f32.mxu0 0.0
    %1835 = vmatmul.mubr.f32.gmra.mrb[0].mxu0 %v1763
    %v1836 = vpop.f32.mrb[0].mxu0
    %v1837 = vadd.f32 %v1758, %v1836
    %v1838 = vpop.f32.mrb[0].mxu0
    %1839 = vdwg.mxu0
    %v1840 = vadd.f32 %v1832, %v1636
    %v1841 = vadd.f32 %v1837, %v1637
    %v1842 = vld [vmem:[%s2 + $0x14e] sm:$0x1]
    %v1843 = vld [vmem:[%s2 + $0x14f] sm:$0x1]
    %v1844 = vsel %vm22, %v1840, 0.0
    %1845 = vadd.xlane.f32.xlu0 %v1844
    %v1846 = vpop.xlane.xlu0 %1845
    %v1847 = vsel %vm22, %v1841, 0.0
    %1848 = vadd.xlane.f32.xlu0 %v1847
    %v1849 = vpop.xlane.xlu0 %1848
    %v1850 = vmul.f32 %v1846, %v29
    %v1851 = vmul.f32 %v1849, %v29
    %v1852 = vsub.f32 %v1840, %v1850
    %v1853 = vsub.f32 %v1841, %v1851
    %v1854 = vmul.f32 %v1852, %v1852
    %v1855 = vmul.f32 %v1853, %v1853
    %v1856 = vsel %vm22, %v1854, 0.0
    %1857 = vadd.xlane.f32.xlu0 %v1856
    %v1858 = vpop.xlane.xlu0 %1857
    %v1859 = vsel %vm22, %v1855, 0.0
    %1860 = vadd.xlane.f32.xlu0 %v1859
    %v1861 = vpop.xlane.xlu0 %1860
    %v1862 = vmul.f32 %v1858, %v29
    %v1863 = vmul.f32 %v1861, %v29
    %v1864 = vadd.f32 %v1862, 1e-12
    %v1865 = vadd.f32 %v1863, 1e-12
    %v1866 = vrsqrt.pop %v1864
    %v1867 = vrsqrt.pop %v1865
    %v1868 = vmul.f32 %v1852, %v1866
    %v1869 = vmul.f32 %v1853, %v1867
    %v1870 = vlaneseq
    %v1871 = vshrl.u32 %v1870, 7
    %v1872 = vsub.s32 0, %v1871
    %v1873 = vrot.slane %v1842, %v1872
    %v1874 = vmul.f32 %v1868, %v1873
    %v1875 = vmul.f32 %v1869, %v1873
    %v1876 = vlaneseq
    %v1877 = vshrl.u32 %v1876, 7
    %v1878 = vsub.s32 0, %v1877
    %v1879 = vrot.slane %v1843, %v1878
    %v1880 = vadd.f32 %v1874, %v1879
    %v1881 = vadd.f32 %v1875, %v1879
    %v1883 = vrot.slane %v1881, 7
    %vm1885 = vcmask 1040384
    %v1886 = vsel %vm1885, %v1880, %v1883
    %v1887 = vld [vmem:[%s2 + $0x150] sm:$0xff]
    %v1888 = vld [vmem:[%s2 + $0x158] sm:$0xff]
    %v1889 = vld [vmem:[%s2 + $0x160] sm:$0xff]
    %v1890 = vld [vmem:[%s2 + $0x168] sm:$0xff]
    %v1891 = vld [vmem:[%s2 + $0x172] sm:$0x1]
    %v1892 = vlaneseq
    %v1893 = vshrl.u32 %v1892, 7
    %v1894 = vsub.s32 0, %v1893
    %v1895 = vrot.slane %v1891, %v1894
    %v1897 = vsel %vm22, %v1886, 0
    %1899 = vmatprep.subr.mxu0 0.0
    %1900 = vmatpush1.msra.mxu0 %v1887
    %1901 = vmatprep.subr.mxu0 0.0
    %1902 = vmatpush1.msra.mxu0 %v1888
    %1903 = vmatprep.subr.mxu0 0.0
    %1904 = vmatpush1.msra.mxu0 %v1889
    %1905 = vmatprep.subr.mxu0 0.0
    %1906 = vmatpush1.msra.mxu0 %v1890
    %1907 = vmatprep.subr.mxu0 0.0
    %1908 = vmatpush1.msra.mxu0 0.0
    %1909 = vmatprep.subr.mxu0 0.0
    %1910 = vmatpush1.msra.mxu0 0.0
    %1911 = vmatprep.subr.mxu0 0.0
    %1912 = vmatpush1.msra.mxu0 0.0
    %1913 = vmatprep.subr.mxu0 0.0
    %1914 = vmatpush1.msra.mxu0 0.0
    %1915 = vmatprep.subr.mxu0 0.0
    %1916 = vmatpush1.msra.mxu0 0.0
    %1917 = vmatprep.subr.mxu0 0.0
    %1918 = vmatpush1.msra.mxu0 0.0
    %1919 = vmatprep.subr.mxu0 0.0
    %1920 = vmatpush1.msra.mxu0 0.0
    %1921 = vmatprep.subr.mxu0 0.0
    %1922 = vmatpush1.msra.mxu0 0.0
    %1923 = vmatprep.subr.mxu0 0.0
    %1924 = vmatpush1.msra.mxu0 0.0
    %1925 = vmatprep.subr.mxu0 0.0
    %1926 = vmatpush1.msra.mxu0 0.0
    %1927 = vmatprep.subr.mxu0 0.0
    %1928 = vmatpush1.msra.mxu0 0.0
    %1929 = vmatprep.subr.mxu0 0.0
    %1930 = vmatpush1.msra.mxu0 0.0
    %1931 = vmatprep.subr.mxu0 0.0
    %1932 = vmatpush1.msra.mxu0 0.0
    %1933 = vmatprep.subr.mxu0 0.0
    %1934 = vmatpush1.msra.mxu0 0.0
    %1935 = vmatprep.subr.mxu0 0.0
    %1936 = vmatpush1.msra.mxu0 0.0
    %1937 = vmatprep.subr.mxu0 0.0
    %1938 = vmatpush1.msra.mxu0 0.0
    %1939 = vmatprep.subr.mxu0 0.0
    %1940 = vmatpush1.msra.mxu0 0.0
    %1941 = vmatprep.subr.mxu0 0.0
    %1942 = vmatpush1.msra.mxu0 0.0
    %1943 = vmatprep.subr.mxu0 0.0
    %1944 = vmatpush1.msra.mxu0 0.0
    %1945 = vmatprep.subr.mxu0 0.0
    %1946 = vmatpush1.msra.mxu0 0.0
    %1947 = vmatprep.subr.mxu0 0.0
    %1948 = vmatpush1.msra.mxu0 0.0
    %1949 = vmatprep.subr.mxu0 0.0
    %1950 = vmatpush1.msra.mxu0 0.0
    %1951 = vmatprep.subr.mxu0 0.0
    %1952 = vmatpush1.msra.mxu0 0.0
    %1953 = vmatprep.subr.mxu0 0.0
    %1954 = vmatpush1.msra.mxu0 0.0
    %1955 = vmatprep.subr.mxu0 0.0
    %1956 = vmatpush1.msra.mxu0 0.0
    %1957 = vmatprep.subr.mxu0 0.0
    %1958 = vmatpush1.msra.mxu0 0.0
    %1959 = vmatprep.subr.mxu0 0.0
    %1960 = vmatpush1.msra.mxu0 0.0
    %1961 = vmatprep.subr.mxu0 0.0
    %1962 = vmatpush1.msra.mxu0 0.0
    %1963 = vmatprep.mubr.f32.mxu0 0.0
    %1964 = vmatmul.mubr.f32.gmra.mrb[0].mxu0 %v1897
    %v1965 = vpop.f32.mrb[0].mxu0
    %v1966 = vadd.f32 %v1895, %v1965
    %v1967 = vpop.f32.mrb[0].mxu0
    %1968 = vdwg.mxu0
    %v1969 = vtanh.pop %v1966
    %v1970 = vld [vmem:[%s3] sm:$0xff]
    %v1971 = vld [vmem:[%s3 + $0x8] sm:$0xff]
    %v1972 = vld [vmem:[%s3 + $0x10] sm:$0xff]
    %v1973 = vld [vmem:[%s3 + $0x18] sm:$0xff]
    %v1974 = vld [vmem:[%s3 + $0x20] sm:$0xff]
    %v1975 = vld [vmem:[%s3 + $0x28] sm:$0xff]
    %v1976 = vld [vmem:[%s3 + $0x30] sm:$0xff]
    %v1977 = vld [vmem:[%s3 + $0x38] sm:$0xff]
    %s1978 = scalar_lea.vmem %s3, 64
    %v1979 = vld [vmem:[%s1978] ss:$8 sm:$0x3]
    %v1981 = vlaneseq
    %v1982 = vshrl.u32 %v1981, 7
    %v1983 = vsub.s32 0, %v1982
    %v1984 = vrot.slane %v1979, %v1983
    %v1985 = vlaneseq
    %v1986 = vshrl.u32 %v1985, 7
    %v1987 = vsub.s32 1, %v1986
    %v1988 = vrot.slane %v1979, %v1987
    %v1992 = vsel %vm22, %v1969, 0
    %1994 = vmatprep.subr.mxu0 %v1971
    %1995 = vmatpush1.msra.mxu0 %v1970
    %1996 = vmatprep.subr.mxu0 %v1973
    %1997 = vmatpush1.msra.mxu0 %v1972
    %1998 = vmatprep.subr.mxu0 %v1975
    %1999 = vmatpush1.msra.mxu0 %v1974
    %2000 = vmatprep.subr.mxu0 %v1977
    %2001 = vmatpush1.msra.mxu0 %v1976
    %2002 = vmatprep.subr.mxu0 0.0
    %2003 = vmatpush1.msra.mxu0 0.0
    %2004 = vmatprep.subr.mxu0 0.0
    %2005 = vmatpush1.msra.mxu0 0.0
    %2006 = vmatprep.subr.mxu0 0.0
    %2007 = vmatpush1.msra.mxu0 0.0
    %2008 = vmatprep.subr.mxu0 0.0
    %2009 = vmatpush1.msra.mxu0 0.0
    %2010 = vmatprep.subr.mxu0 0.0
    %2011 = vmatpush1.msra.mxu0 0.0
    %2012 = vmatprep.subr.mxu0 0.0
    %2013 = vmatpush1.msra.mxu0 0.0
    %2014 = vmatprep.subr.mxu0 0.0
    %2015 = vmatpush1.msra.mxu0 0.0
    %2016 = vmatprep.subr.mxu0 0.0
    %2017 = vmatpush1.msra.mxu0 0.0
    %2018 = vmatprep.subr.mxu0 0.0
    %2019 = vmatpush1.msra.mxu0 0.0
    %2020 = vmatprep.subr.mxu0 0.0
    %2021 = vmatpush1.msra.mxu0 0.0
    %2022 = vmatprep.subr.mxu0 0.0
    %2023 = vmatpush1.msra.mxu0 0.0
    %2024 = vmatprep.subr.mxu0 0.0
    %2025 = vmatpush1.msra.mxu0 0.0
    %2026 = vmatprep.subr.mxu0 0.0
    %2027 = vmatpush1.msra.mxu0 0.0
    %2028 = vmatprep.subr.mxu0 0.0
    %2029 = vmatpush1.msra.mxu0 0.0
    %2030 = vmatprep.subr.mxu0 0.0
    %2031 = vmatpush1.msra.mxu0 0.0
    %2032 = vmatprep.subr.mxu0 0.0
    %2033 = vmatpush1.msra.mxu0 0.0
    %2034 = vmatprep.subr.mxu0 0.0
    %2035 = vmatpush1.msra.mxu0 0.0
    %2036 = vmatprep.subr.mxu0 0.0
    %2037 = vmatpush1.msra.mxu0 0.0
    %2038 = vmatprep.subr.mxu0 0.0
    %2039 = vmatpush1.msra.mxu0 0.0
    %2040 = vmatprep.subr.mxu0 0.0
    %2041 = vmatpush1.msra.mxu0 0.0
    %2042 = vmatprep.subr.mxu0 0.0
    %2043 = vmatpush1.msra.mxu0 0.0
    %2044 = vmatprep.subr.mxu0 0.0
    %2045 = vmatpush1.msra.mxu0 0.0
    %2046 = vmatprep.subr.mxu0 0.0
    %2047 = vmatpush1.msra.mxu0 0.0
    %2048 = vmatprep.subr.mxu0 0.0
    %2049 = vmatpush1.msra.mxu0 0.0
    %2050 = vmatprep.subr.mxu0 0.0
    %2051 = vmatpush1.msra.mxu0 0.0
    %2052 = vmatprep.subr.mxu0 0.0
    %2053 = vmatpush1.msra.mxu0 0.0
    %2054 = vmatprep.subr.mxu0 0.0
    %2055 = vmatpush1.msra.mxu0 0.0
    %2056 = vmatprep.subr.mxu0 0.0
    %2057 = vmatpush1.msra.mxu0 0.0
    %2058 = vmatprep.mubr.f32.mxu0 0.0
    %2059 = vmatmul.mubr.f32.gmra.mrb[0].mxu0 %v1992
    %v2060 = vpop.f32.mrb[0].mxu0
    %v2061 = vadd.f32 %v1984, %v2060
    %v2062 = vpop.f32.mrb[0].mxu0
    %v2063 = vadd.f32 %v1988, %v2062
    %2064 = vdwg.mxu0
    %v2065 = vmax.f32 %v2061, 0.0
    %v2066 = vmax.f32 %v2063, 0.0
    %v2067 = vld [vmem:[%s3 + $0x40] sm:$0x6]
    %v2068 = vld [vmem:[%s3 + $0x48] sm:$0x6]
    %v2069 = vld [vmem:[%s3 + $0x43] ss:$0 sm:$0xff]
    %v2072 = vrot.slane %v2067, 1
    %v2073 = vrot.slane %v2068, 1
    %2076 = vmatprep.subr.mxu0 %v2073
    %2077 = vmatpush1.xpose.msra.mxu0 %v2072
    %2078 = vmatprep.subr.mxu0 0.0
    %2079 = vmatpush1.xpose.msra.mxu0 0.0
    %2080 = vmatprep.subr.mxu0 0.0
    %2081 = vmatpush1.xpose.msra.mxu0 0.0
    %2082 = vmatprep.subr.mxu0 0.0
    %2083 = vmatpush1.xpose.msra.mxu0 0.0
    %2084 = vmatprep.subr.mxu0 0.0
    %2085 = vmatpush1.xpose.msra.mxu0 0.0
    %2086 = vmatprep.subr.mxu0 0.0
    %2087 = vmatpush1.xpose.msra.mxu0 0.0
    %2088 = vmatprep.subr.mxu0 0.0
    %2089 = vmatpush1.xpose.msra.mxu0 0.0
    %2090 = vmatprep.subr.mxu0 0.0
    %2091 = vmatpush1.xpose.msra.mxu0 0.0
    %2092 = vmatprep.subr.mxu0 0.0
    %2093 = vmatpush1.xpose.msra.mxu0 0.0
    %2094 = vmatprep.subr.mxu0 0.0
    %2095 = vmatpush1.xpose.msra.mxu0 0.0
    %2096 = vmatprep.subr.mxu0 0.0
    %2097 = vmatpush1.xpose.msra.mxu0 0.0
    %2098 = vmatprep.subr.mxu0 0.0
    %2099 = vmatpush1.xpose.msra.mxu0 0.0
    %2100 = vmatprep.subr.mxu0 0.0
    %2101 = vmatpush1.xpose.msra.mxu0 0.0
    %2102 = vmatprep.subr.mxu0 0.0
    %2103 = vmatpush1.xpose.msra.mxu0 0.0
    %2104 = vmatprep.subr.mxu0 0.0
    %2105 = vmatpush1.xpose.msra.mxu0 0.0
    %2106 = vmatprep.subr.mxu0 0.0
    %2107 = vmatpush1.xpose.msra.mxu0 0.0
    %2108 = vmatprep.subr.mxu0 0.0
    %2109 = vmatpush1.xpose.msra.mxu0 0.0
    %2110 = vmatprep.subr.mxu0 0.0
    %2111 = vmatpush1.xpose.msra.mxu0 0.0
    %2112 = vmatprep.subr.mxu0 0.0
    %2113 = vmatpush1.xpose.msra.mxu0 0.0
    %2114 = vmatprep.subr.mxu0 0.0
    %2115 = vmatpush1.xpose.msra.mxu0 0.0
    %2116 = vmatprep.subr.mxu0 0.0
    %2117 = vmatpush1.xpose.msra.mxu0 0.0
    %2118 = vmatprep.subr.mxu0 0.0
    %2119 = vmatpush1.xpose.msra.mxu0 0.0
    %2120 = vmatprep.subr.mxu0 0.0
    %2121 = vmatpush1.xpose.msra.mxu0 0.0
    %2122 = vmatprep.subr.mxu0 0.0
    %2123 = vmatpush1.xpose.msra.mxu0 0.0
    %2124 = vmatprep.subr.mxu0 0.0
    %2125 = vmatpush1.xpose.msra.mxu0 0.0
    %2126 = vmatprep.subr.mxu0 0.0
    %2127 = vmatpush1.xpose.msra.mxu0 0.0
    %2128 = vmatprep.subr.mxu0 0.0
    %2129 = vmatpush1.xpose.msra.mxu0 0.0
    %2130 = vmatprep.subr.mxu0 0.0
    %2131 = vmatpush1.xpose.msra.mxu0 0.0
    %2132 = vmatprep.subr.mxu0 0.0
    %2133 = vmatpush1.xpose.msra.mxu0 0.0
    %2134 = vmatprep.subr.mxu0 0.0
    %2135 = vmatpush1.xpose.msra.mxu0 0.0
    %2136 = vmatprep.subr.mxu0 0.0
    %2137 = vmatpush1.xpose.msra.mxu0 0.0
    %2138 = vmatprep.subr.mxu0 0.0
    %2139 = vmatpush1.xpose.msra.mxu0 0.0
    %2140 = vmatprep.mubr.f32.mxu0 %v2066
    %2141 = vmatmul.mubr.f32.gmra.mrb[0].mxu0 %v2065
    %v2142 = vpop.f32.mrb[0].mxu0
    %v2143 = vadd.f32 %v2069, %v2142
    %v2144 = vpop.f32.mrb[0].mxu0
    %2145 = vdwg.mxu0
    %vm2146 = vcmask 15360
    %v2147 = vsel %vm2146, %v2143, 0.0
    %2148 = vst [vmem:[#allocation2] sm:$0x3] %v2147
    // Predicated region
    $region18: #{forward.1} parent=1 // pred_check
      _
    $region19: #{forward.1} parent=1 // pred_check_branch
      %2150 = sbr.rel (0) target = $region21
    $region20: #{forward.1} parent=1 // pred_region
      %s2152 = ssub.s32 32, 32
      %2153 = vsyncadd [#allocation3], %s2152
      %s2155 = sshll.u32 [#allocation2], 4
      %s2156 = int_to_ptr.vmem [resolvable:$true] %s2155
      %2158 = dma.vmem_to_hbm [thread:$0]  %s2156, 32, %s4, [#allocation3]
    $region21: #{forward.1} parent=1 // pred_fallthru
      _
    // Predicated region
    $region22: #{forward.1} parent=1 // pred_check
      _
    $region23: #{forward.1} parent=1 // pred_check_branch
      %2160 = sbr.rel (0) target = $region25
    $region24: #{forward.1} parent=1 // pred_region
      %2161 = dma.done [#allocation3], 32
    $region25: #{forward.1} parent=1 // pred_fallthru
      _
    %2162 = vsyncpa [#allocation3], 1

</llo_original>
